<compile_context>
chip_gen: v5e
topology: v5e:2x2
jax: 0.10.0
libtpu: 0.0.40
codegen_flags: <defaults>
</compile_context>

<pallas_src>
import math

import jax
import jax.numpy as jnp
from jax.experimental import pallas as pl
from jax.experimental.pallas import tpu as pltpu


# ---------------- config (small, synthetic) ----------------
BATCH = 2
SEQ = 8
HIDDEN = 32
NUM_HEADS = 4
HEAD_DIM = HIDDEN // NUM_HEADS
INTERMEDIATE = 64
LN_EPS = 1e-12


def _layer_norm(x, gamma, beta, eps):
    mean = jnp.mean(x, axis=-1, keepdims=True)
    var = jnp.mean((x - mean) ** 2, axis=-1, keepdims=True)
    return (x - mean) * jax.lax.rsqrt(var + eps) * gamma + beta


def _gelu(x):
    # BERT 'gelu' (erf-based, exact)
    return 0.5 * x * (1.0 + jax.lax.erf(x / jnp.sqrt(2.0).astype(x.dtype)))


def bert_layer_pallas(hidden_states, attention_mask, params, *, num_heads=NUM_HEADS):
    B, S, H = hidden_states.shape
    R = B * S
    I = params["wi"].shape[1]
    NH = num_heads
    HD = H // NH
    G = B * NH  # attention groups (batch x head), single batch dim for einsums

    def kernel(x_ref, mask_ref, wqkv_ref, wo_ref, wi_ref, w2_ref,
               bi_ref, vecs_ref, o_ref):
        x = x_ref[...]                                   # (R, H) f32
        xb = x.astype(jnp.bfloat16)
        vecs = vecs_ref[...]                             # (9, H) f32

        # ---- fused QKV projection: one MXU pass, N = 3H ----
        qkv = jnp.dot(xb, wqkv_ref[...],
                      preferred_element_type=jnp.float32)          # (R, 3H) f32
        q = (qkv[:, 0:H] + vecs[0:1]).astype(jnp.bfloat16)
        k = (qkv[:, H:2 * H] + vecs[1:2]).astype(jnp.bfloat16)
        v = (qkv[:, 2 * H:3 * H] + vecs[2:3]).astype(jnp.bfloat16)

        # split heads: (R,H) -> (B,S,NH,HD) -> (B,NH,S,HD) -> (G,S,HD)
        def heads(t):
            return t.reshape(B, S, NH, HD).transpose(0, 2, 1, 3).reshape(G, S, HD)

        qh, kh, vh = heads(q), heads(k), heads(v)

        inv_sqrt_d = jnp.float32(1.0 / math.sqrt(HD))
        # group-batched scores: only the B in-batch (S,S) blocks are computed,
        # never the masked-out cross-batch blocks of a flattened (R,R) attention.
        scores = jnp.einsum('gqd,gkd->gqk', qh, kh,
                            preferred_element_type=jnp.float32) * inv_sqrt_d
        scores = scores + mask_ref[...][:, None, :]                 # (G,1,S) additive
        scores = scores - jnp.max(scores, axis=-1, keepdims=True)
        p = jnp.exp(scores)                                         # f32 numerics
        # denominator >= 1 after row-max subtraction -> approx reciprocal is safe
        p = p * pl.reciprocal(jnp.sum(p, axis=-1, keepdims=True), approx=True)

        ctx = jnp.einsum('gqk,gkd->gqd', p.astype(jnp.bfloat16), vh,
                         preferred_element_type=jnp.float32)        # (G,S,HD)
        # merge heads back to (R,H); the head contraction is then folded into
        # the single (R,H)@(H,H) output-projection matmul below.
        ctx = ctx.reshape(B, NH, S, HD).transpose(0, 2, 1, 3).reshape(R, H)

        # ---- BertSelfOutput: dense + residual + LayerNorm ----
        attn = jnp.dot(ctx.astype(jnp.bfloat16), wo_ref[...],
                       preferred_element_type=jnp.float32) + vecs[3:4]
        attn = _layer_norm(attn + x, vecs[4:5], vecs[5:6], LN_EPS)

        # ---- BertIntermediate: dense + gelu ----
        inter = _gelu(jnp.dot(attn.astype(jnp.bfloat16), wi_ref[...],
                              preferred_element_type=jnp.float32) + bi_ref[...])

        # ---- BertOutput: dense + residual + LayerNorm ----
        out = jnp.dot(inter.astype(jnp.bfloat16), w2_ref[...],
                      preferred_element_type=jnp.float32) + vecs[6:7]
        out = _layer_norm(out + attn, vecs[7:8], vecs[8:9], LN_EPS)

        o_ref[...] = out.astype(o_ref.dtype)

    # ---- wrapper-side layout plumbing (free XLA reshapes / casts) ----
    x_flat = hidden_states.reshape(R, H).astype(jnp.float32)

    # Per-key BERT additive mask, replicated per head: (B,S) -> (G,S), G=B*NH.
    mask_g = jnp.repeat(attention_mask.astype(jnp.float32), NH, axis=0)

    w_qkv = jnp.concatenate([params["wq"], params["wk"], params["wv"]],
                            axis=1).astype(jnp.bfloat16)            # (H, 3H)
    wo = params["wo"].astype(jnp.bfloat16)                          # (H, H)
    wi = params["wi"].astype(jnp.bfloat16)                          # (H, I)
    w2 = params["w2"].astype(jnp.bfloat16)                          # (I, H)
    bi = params["bi"].reshape(1, I).astype(jnp.float32)             # (1, I)
    vecs = jnp.concatenate([params["bq"].reshape(1, H),
                            params["bk"].reshape(1, H),
                            params["bv"].reshape(1, H),
                            params["bo"].reshape(1, H),
                            params["ln1_g"].reshape(1, H),
                            params["ln1_b"].reshape(1, H),
                            params["b2"].reshape(1, H),
                            params["ln2_g"].reshape(1, H),
                            params["ln2_b"].reshape(1, H)],
                           axis=0).astype(jnp.float32)              # (9, H)

    def full(shape):
        return pl.BlockSpec(shape, lambda i, _n=len(shape): (0,) * _n)

    out_flat = pl.pallas_call(
        kernel,
        out_shape=jax.ShapeDtypeStruct((R, H), hidden_states.dtype),
        grid_spec=pltpu.PrefetchScalarGridSpec(
            num_scalar_prefetch=0,
            grid=(1,),                 # everything fits comfortably in VMEM at toy size
            in_specs=[
                full((R, H)),          # flattened hidden states
                full((G, S)),          # per-key additive mask, replicated per head
                full((H, 3 * H)),      # fused Q/K/V weight (bf16)
                full((H, H)),          # attention output projection (bf16)
                full((H, I)),          # intermediate weight (bf16)
                full((I, H)),          # output weight (bf16)
                full((1, I)),          # intermediate bias
                full((9, H)),          # packed bq/bk/bv/bo/ln1/b2/ln2 vectors
            ],
            out_specs=full((R, H)),
        ),
        compiler_params=pltpu.CompilerParams(
            dimension_semantics=("arbitrary",),
            vmem_limit_bytes=32 * 1024 * 1024),
    )(x_flat, mask_g, w_qkv, wo, wi, w2, bi, vecs)

    return out_flat.reshape(B, S, H)


def bert_layer_ref(hidden_states, attention_mask, params):
    """Pure-JAX f32 reference matching the PyTorch BertLayer forward (eval mode)."""
    B, S, H = hidden_states.shape
    x = hidden_states
    q = x @ params["wq"] + params["bq"]
    k = x @ params["wk"] + params["bk"]
    v = x @ params["wv"] + params["bv"]

    def heads(t):
        return t.reshape(B, S, NUM_HEADS, HEAD_DIM).transpose(0, 2, 1, 3)

    qh, kh, vh = heads(q), heads(k), heads(v)
    scores = jnp.einsum("bhqd,bhkd->bhqk", qh, kh) / math.sqrt(HEAD_DIM)
    scores = scores + attention_mask[:, None, None, :]
    probs = jax.nn.softmax(scores, axis=-1)
    ctx = jnp.einsum("bhqk,bhkd->bhqd", probs, vh)
    ctx = ctx.transpose(0, 2, 1, 3).reshape(B, S, H)

    attn = ctx @ params["wo"] + params["bo"]
    attn = _layer_norm(attn + x, params["ln1_g"], params["ln1_b"], LN_EPS)

    inter = _gelu(attn @ params["wi"] + params["bi"])
    out = inter @ params["w2"] + params["b2"]
    out = _layer_norm(out + attn, params["ln2_g"], params["ln2_b"], LN_EPS)
    return out


def make_params(key):
    ks = jax.random.split(key, 12)
    scale = 0.02
    return {
        "wq": scale * jax.random.normal(ks[0], (HIDDEN, HIDDEN), jnp.float32),
        "bq": jnp.zeros((1, HIDDEN), jnp.float32),
        "wk": scale * jax.random.normal(ks[1], (HIDDEN, HIDDEN), jnp.float32),
        "bk": jnp.zeros((1, HIDDEN), jnp.float32),
        "wv": scale * jax.random.normal(ks[2], (HIDDEN, HIDDEN), jnp.float32),
        "bv": jnp.zeros((1, HIDDEN), jnp.float32),
        "wo": scale * jax.random.normal(ks[3], (HIDDEN, HIDDEN), jnp.float32),
        "bo": 0.01 * jnp.ones((1, HIDDEN), jnp.float32),
        "ln1_g": jnp.ones((1, HIDDEN), jnp.float32),
        "ln1_b": jnp.zeros((1, HIDDEN), jnp.float32),
        "wi": scale * jax.random.normal(ks[4], (HIDDEN, INTERMEDIATE), jnp.float32),
        "bi": 0.01 * jnp.ones((1, INTERMEDIATE), jnp.float32),
        "w2": scale * jax.random.normal(ks[5], (INTERMEDIATE, HIDDEN), jnp.float32),
        "b2": 0.01 * jnp.ones((1, HIDDEN), jnp.float32),
        "ln2_g": jnp.ones((1, HIDDEN), jnp.float32),
        "ln2_b": jnp.zeros((1, HIDDEN), jnp.float32),
    }


if __name__ == "__main__":
    key = jax.random.PRNGKey(0)
    k_x, k_p = jax.random.split(key)

    hidden_states = jax.random.normal(k_x, (BATCH, SEQ, HIDDEN), jnp.float32)

    # Additive attention mask, BERT style: 0 for attended, -10000 for masked tokens.
    valid = jnp.array([[1] * SEQ, [1] * (SEQ - 2) + [0] * 2], jnp.float32)
    attention_mask = (1.0 - valid) * -10000.0  # (B, S)

    params = make_params(k_p)

    out = bert_layer_pallas(hidden_states, attention_mask, params)
    out = jax.block_until_ready(out)

    ref = bert_layer_ref(hidden_states, attention_mask, params)
    assert out.shape == (BATCH, SEQ, HIDDEN)
    # bf16 matmul operands (f32 accumulation) + approx softmax reciprocal -> looser tol
    assert jnp.allclose(out, ref, atol=2e-2, rtol=2e-2), "mismatch vs JAX reference"

    print("KERNEL_OK")
</pallas_src>

<mosaic_0001>
module attributes {stable_mosaic.version = 11 : i64} {
  func.func @kernel(%arg0: i32, %arg1: memref<16x32xf32, #tpu.memory_space<vmem>>, %arg2: memref<8x8xf32, #tpu.memory_space<vmem>>, %arg3: memref<32x96xbf16, #tpu.memory_space<vmem>>, %arg4: memref<32x32xbf16, #tpu.memory_space<vmem>>, %arg5: memref<32x64xbf16, #tpu.memory_space<vmem>>, %arg6: memref<64x32xbf16, #tpu.memory_space<vmem>>, %arg7: memref<1x64xf32, #tpu.memory_space<vmem>>, %arg8: memref<9x32xf32, #tpu.memory_space<vmem>>, %arg9: memref<16x32xf32, #tpu.memory_space<vmem>>) attributes {dimension_semantics = [#tpu.dimension_semantics<arbitrary>], iteration_bounds = array<i64: 1>, scalar_prefetch = 0 : i64, scratch_operands = 0 : i64, tpu.core_type = #tpu.core_type<tc>, window_params = [{pipeline_mode = #tpu.pipeline_mode<synchronous>, transform_indices = @transform_0, window_bounds = array<i64: 16, 32>}, {pipeline_mode = #tpu.pipeline_mode<synchronous>, transform_indices = @transform_1, window_bounds = array<i64: 8, 8>}, {pipeline_mode = #tpu.pipeline_mode<synchronous>, transform_indices = @transform_2, window_bounds = array<i64: 32, 96>}, {pipeline_mode = #tpu.pipeline_mode<synchronous>, transform_indices = @transform_3, window_bounds = array<i64: 32, 32>}, {pipeline_mode = #tpu.pipeline_mode<synchronous>, transform_indices = @transform_4, window_bounds = array<i64: 32, 64>}, {pipeline_mode = #tpu.pipeline_mode<synchronous>, transform_indices = @transform_5, window_bounds = array<i64: 64, 32>}, {pipeline_mode = #tpu.pipeline_mode<synchronous>, transform_indices = @transform_6, window_bounds = array<i64: 1, 64>}, {pipeline_mode = #tpu.pipeline_mode<synchronous>, transform_indices = @transform_7, window_bounds = array<i64: 9, 32>}, {pipeline_mode = #tpu.pipeline_mode<synchronous>, transform_indices = @transform_8, window_bounds = array<i64: 16, 32>}]} {
    %c0 = arith.constant 0 : index
    %c0_0 = arith.constant 0 : index
    %0 = vector.load %arg1[%c0, %c0_0] : memref<16x32xf32, #tpu.memory_space<vmem>>, vector<16x32xf32>
    %1 = arith.truncf %0 : vector<16x32xf32> to vector<16x32xbf16>
    %c0_1 = arith.constant 0 : index
    %c0_2 = arith.constant 0 : index
    %2 = vector.load %arg8[%c0_1, %c0_2] : memref<9x32xf32, #tpu.memory_space<vmem>>, vector<9x32xf32>
    %c0_3 = arith.constant 0 : index
    %c0_4 = arith.constant 0 : index
    %3 = vector.load %arg3[%c0_3, %c0_4] : memref<32x96xbf16, #tpu.memory_space<vmem>>, vector<32x96xbf16>
    %cst = arith.constant dense<0.000000e+00> : vector<16x96xf32>
    %4 = tpu.matmul %1, %3, %cst {dimension_numbers = #tpu.dot_dimension_numbers<[1], [0], [0], [1], [0, 0, 1, 1], [], []>} : vector<16x32xbf16>, vector<32x96xbf16>, vector<16x96xf32> -> vector<16x96xf32>
    %5 = vector.extract_strided_slice %4 {offsets = [0, 0], sizes = [16, 32], strides = [1, 1]} : vector<16x96xf32> to vector<16x32xf32>
    %6 = vector.extract_strided_slice %2 {offsets = [0, 0], sizes = [1, 32], strides = [1, 1]} : vector<9x32xf32> to vector<1x32xf32>
    %7 = vector.broadcast %6 : vector<1x32xf32> to vector<16x32xf32>
    %8 = arith.addf %5, %7 : vector<16x32xf32>
    %9 = arith.truncf %8 : vector<16x32xf32> to vector<16x32xbf16>
    %10 = vector.extract_strided_slice %4 {offsets = [0, 32], sizes = [16, 32], strides = [1, 1]} : vector<16x96xf32> to vector<16x32xf32>
    %11 = vector.extract_strided_slice %2 {offsets = [1, 0], sizes = [1, 32], strides = [1, 1]} : vector<9x32xf32> to vector<1x32xf32>
    %12 = vector.broadcast %11 : vector<1x32xf32> to vector<16x32xf32>
    %13 = arith.addf %10, %12 : vector<16x32xf32>
    %14 = arith.truncf %13 : vector<16x32xf32> to vector<16x32xbf16>
    %15 = vector.extract_strided_slice %4 {offsets = [0, 64], sizes = [16, 32], strides = [1, 1]} : vector<16x96xf32> to vector<16x32xf32>
    %16 = vector.extract_strided_slice %2 {offsets = [2, 0], sizes = [1, 32], strides = [1, 1]} : vector<9x32xf32> to vector<1x32xf32>
    %17 = vector.broadcast %16 : vector<1x32xf32> to vector<16x32xf32>
    %18 = arith.addf %15, %17 : vector<16x32xf32>
    %19 = arith.truncf %18 : vector<16x32xf32> to vector<16x32xbf16>
    %20 = vector.shape_cast %9 : vector<16x32xbf16> to vector<2x8x4x8xbf16>
    %21 = tpu.transpose %20, [0, 2, 1, 3] : vector<2x8x4x8xbf16> -> vector<2x4x8x8xbf16>
    %22 = vector.shape_cast %21 : vector<2x4x8x8xbf16> to vector<8x8x8xbf16>
    %23 = vector.shape_cast %14 : vector<16x32xbf16> to vector<2x8x4x8xbf16>
    %24 = tpu.transpose %23, [0, 2, 1, 3] : vector<2x8x4x8xbf16> -> vector<2x4x8x8xbf16>
    %25 = vector.shape_cast %24 : vector<2x4x8x8xbf16> to vector<8x8x8xbf16>
    %26 = vector.shape_cast %19 : vector<16x32xbf16> to vector<2x8x4x8xbf16>
    %27 = tpu.transpose %26, [0, 2, 1, 3] : vector<2x8x4x8xbf16> -> vector<2x4x8x8xbf16>
    %28 = vector.shape_cast %27 : vector<2x4x8x8xbf16> to vector<8x8x8xbf16>
    "tpu.trace_start"() <{level = 10 : i32, message = "gqd,gkd->gqk"}> : () -> ()
    %cst_5 = arith.constant dense<0.000000e+00> : vector<8x8x8xf32>
    %29 = tpu.matmul %22, %25, %cst_5 {dimension_numbers = #tpu.dot_dimension_numbers<[2], [2], [1], [1], [0, 0, 0, 1, 1, 1], [0], [0]>} : vector<8x8x8xbf16>, vector<8x8x8xbf16>, vector<8x8x8xf32> -> vector<8x8x8xf32>
    "tpu.trace_stop"() : () -> ()
    %cst_6 = arith.constant 0.353553385 : f32
    %30 = vector.broadcast %cst_6 : f32 to vector<8x8x8xf32>
    %31 = arith.mulf %29, %30 : vector<8x8x8xf32>
    %c0_7 = arith.constant 0 : index
    %c0_8 = arith.constant 0 : index
    %32 = vector.load %arg2[%c0_7, %c0_8] : memref<8x8xf32, #tpu.memory_space<vmem>>, vector<8x8xf32>
    %33 = vector.shape_cast %32 : vector<8x8xf32> to vector<8x1x8xf32>
    %34 = vector.broadcast %33 : vector<8x1x8xf32> to vector<8x8x8xf32>
    %35 = arith.addf %31, %34 : vector<8x8x8xf32>
    %cst_9 = arith.constant dense<0xFF800000> : vector<8x8xf32>
    %36 = vector.multi_reduction <maximumf>, %35, %cst_9 [2] : vector<8x8x8xf32> to vector<8x8xf32>
    %37 = vector.shape_cast %36 : vector<8x8xf32> to vector<8x8x1xf32>
    %38 = vector.broadcast %37 : vector<8x8x1xf32> to vector<8x8x8xf32>
    %39 = arith.subf %35, %38 : vector<8x8x8xf32>
    %40 = math.exp %39 : vector<8x8x8xf32>
    %cst_10 = arith.constant dense<0.000000e+00> : vector<8x8xf32>
    %41 = vector.multi_reduction <add>, %40, %cst_10 [2] : vector<8x8x8xf32> to vector<8x8xf32>
    %42 = vector.shape_cast %41 : vector<8x8xf32> to vector<8x8x1xf32>
    %43 = tpu.reciprocal %42 {approx = true} : vector<8x8x1xf32> -> vector<8x8x1xf32>
    %44 = vector.broadcast %43 : vector<8x8x1xf32> to vector<8x8x8xf32>
    %45 = arith.mulf %40, %44 : vector<8x8x8xf32>
    %46 = arith.truncf %45 : vector<8x8x8xf32> to vector<8x8x8xbf16>
    "tpu.trace_start"() <{level = 10 : i32, message = "gqk,gkd->gqd"}> : () -> ()
    %cst_11 = arith.constant dense<0.000000e+00> : vector<8x8x8xf32>
    %47 = tpu.matmul %46, %28, %cst_11 {dimension_numbers = #tpu.dot_dimension_numbers<[2], [1], [1], [2], [0, 0, 0, 1, 1, 2], [0], [0]>} : vector<8x8x8xbf16>, vector<8x8x8xbf16>, vector<8x8x8xf32> -> vector<8x8x8xf32>
    "tpu.trace_stop"() : () -> ()
    %48 = vector.shape_cast %47 : vector<8x8x8xf32> to vector<2x4x8x8xf32>
    %49 = tpu.transpose %48, [0, 2, 1, 3] : vector<2x4x8x8xf32> -> vector<2x8x4x8xf32>
    %50 = vector.shape_cast %49 : vector<2x8x4x8xf32> to vector<16x32xf32>
    %51 = arith.truncf %50 : vector<16x32xf32> to vector<16x32xbf16>
    %c0_12 = arith.constant 0 : index
    %c0_13 = arith.constant 0 : index
    %52 = vector.load %arg4[%c0_12, %c0_13] : memref<32x32xbf16, #tpu.memory_space<vmem>>, vector<32x32xbf16>
    %cst_14 = arith.constant dense<0.000000e+00> : vector<16x32xf32>
    %53 = tpu.matmul %51, %52, %cst_14 {dimension_numbers = #tpu.dot_dimension_numbers<[1], [0], [0], [1], [0, 0, 1, 1], [], []>} : vector<16x32xbf16>, vector<32x32xbf16>, vector<16x32xf32> -> vector<16x32xf32>
    %54 = vector.extract_strided_slice %2 {offsets = [3, 0], sizes = [1, 32], strides = [1, 1]} : vector<9x32xf32> to vector<1x32xf32>
    %55 = vector.broadcast %54 : vector<1x32xf32> to vector<16x32xf32>
    %56 = arith.addf %53, %55 : vector<16x32xf32>
    %57 = arith.addf %56, %0 : vector<16x32xf32>
    %58 = vector.extract_strided_slice %2 {offsets = [4, 0], sizes = [1, 32], strides = [1, 1]} : vector<9x32xf32> to vector<1x32xf32>
    %59 = vector.extract_strided_slice %2 {offsets = [5, 0], sizes = [1, 32], strides = [1, 1]} : vector<9x32xf32> to vector<1x32xf32>
    %cst_15 = arith.constant dense<0.000000e+00> : vector<16xf32>
    %60 = vector.multi_reduction <add>, %57, %cst_15 [1] : vector<16x32xf32> to vector<16xf32>
    %61 = vector.shape_cast %60 : vector<16xf32> to vector<16x1xf32>
    %cst_16 = arith.constant 3.200000e+01 : f32
    %62 = vector.broadcast %cst_16 : f32 to vector<16x1xf32>
    %63 = arith.divf %61, %62 : vector<16x1xf32>
    %64 = vector.broadcast %63 : vector<16x1xf32> to vector<16x32xf32>
    %65 = arith.subf %57, %64 : vector<16x32xf32>
    %66 = arith.mulf %65, %65 : vector<16x32xf32>
    %cst_17 = arith.constant dense<0.000000e+00> : vector<16xf32>
    %67 = vector.multi_reduction <add>, %66, %cst_17 [1] : vector<16x32xf32> to vector<16xf32>
    %68 = vector.shape_cast %67 : vector<16xf32> to vector<16x1xf32>
    %cst_18 = arith.constant 3.200000e+01 : f32
    %69 = vector.broadcast %cst_18 : f32 to vector<16x1xf32>
    %70 = arith.divf %68, %69 : vector<16x1xf32>
    %71 = vector.broadcast %63 : vector<16x1xf32> to vector<16x32xf32>
    %72 = arith.subf %57, %71 : vector<16x32xf32>
    %cst_19 = arith.constant 9.99999996E-13 : f32
    %73 = vector.broadcast %cst_19 : f32 to vector<16x1xf32>
    %74 = arith.addf %70, %73 : vector<16x1xf32>
    %75 = math.rsqrt %74 : vector<16x1xf32>
    %76 = vector.broadcast %75 : vector<16x1xf32> to vector<16x32xf32>
    %77 = arith.mulf %72, %76 : vector<16x32xf32>
    %78 = vector.broadcast %58 : vector<1x32xf32> to vector<16x32xf32>
    %79 = arith.mulf %77, %78 : vector<16x32xf32>
    %80 = vector.broadcast %59 : vector<1x32xf32> to vector<16x32xf32>
    %81 = arith.addf %79, %80 : vector<16x32xf32>
    %82 = arith.truncf %81 : vector<16x32xf32> to vector<16x32xbf16>
    %c0_20 = arith.constant 0 : index
    %c0_21 = arith.constant 0 : index
    %83 = vector.load %arg5[%c0_20, %c0_21] : memref<32x64xbf16, #tpu.memory_space<vmem>>, vector<32x64xbf16>
    %cst_22 = arith.constant dense<0.000000e+00> : vector<16x64xf32>
    %84 = tpu.matmul %82, %83, %cst_22 {dimension_numbers = #tpu.dot_dimension_numbers<[1], [0], [0], [1], [0, 0, 1, 1], [], []>} : vector<16x32xbf16>, vector<32x64xbf16>, vector<16x64xf32> -> vector<16x64xf32>
    %c0_23 = arith.constant 0 : index
    %c0_24 = arith.constant 0 : index
    %85 = vector.load %arg7[%c0_23, %c0_24] : memref<1x64xf32, #tpu.memory_space<vmem>>, vector<1x64xf32>
    %86 = vector.broadcast %85 : vector<1x64xf32> to vector<16x64xf32>
    %87 = arith.addf %84, %86 : vector<16x64xf32>
    %cst_25 = arith.constant 5.000000e-01 : f32
    %88 = vector.broadcast %cst_25 : f32 to vector<16x64xf32>
    %89 = arith.mulf %88, %87 : vector<16x64xf32>
    %cst_26 = arith.constant 2.000000e+00 : f32
    %90 = math.sqrt %cst_26 : f32
    %91 = vector.broadcast %90 : f32 to vector<16x64xf32>
    %92 = arith.divf %87, %91 : vector<16x64xf32>
    %93 = math.erf %92 : vector<16x64xf32>
    %cst_27 = arith.constant 1.000000e+00 : f32
    %94 = vector.broadcast %cst_27 : f32 to vector<16x64xf32>
    %95 = arith.addf %94, %93 : vector<16x64xf32>
    %96 = arith.mulf %89, %95 : vector<16x64xf32>
    %97 = arith.truncf %96 : vector<16x64xf32> to vector<16x64xbf16>
    %c0_28 = arith.constant 0 : index
    %c0_29 = arith.constant 0 : index
    %98 = vector.load %arg6[%c0_28, %c0_29] : memref<64x32xbf16, #tpu.memory_space<vmem>>, vector<64x32xbf16>
    %cst_30 = arith.constant dense<0.000000e+00> : vector<16x32xf32>
    %99 = tpu.matmul %97, %98, %cst_30 {dimension_numbers = #tpu.dot_dimension_numbers<[1], [0], [0], [1], [0, 0, 1, 1], [], []>} : vector<16x64xbf16>, vector<64x32xbf16>, vector<16x32xf32> -> vector<16x32xf32>
    %100 = vector.extract_strided_slice %2 {offsets = [6, 0], sizes = [1, 32], strides = [1, 1]} : vector<9x32xf32> to vector<1x32xf32>
    %101 = vector.broadcast %100 : vector<1x32xf32> to vector<16x32xf32>
    %102 = arith.addf %99, %101 : vector<16x32xf32>
    %103 = arith.addf %102, %81 : vector<16x32xf32>
    %104 = vector.extract_strided_slice %2 {offsets = [7, 0], sizes = [1, 32], strides = [1, 1]} : vector<9x32xf32> to vector<1x32xf32>
    %105 = vector.extract_strided_slice %2 {offsets = [8, 0], sizes = [1, 32], strides = [1, 1]} : vector<9x32xf32> to vector<1x32xf32>
    %cst_31 = arith.constant dense<0.000000e+00> : vector<16xf32>
    %106 = vector.multi_reduction <add>, %103, %cst_31 [1] : vector<16x32xf32> to vector<16xf32>
    %107 = vector.shape_cast %106 : vector<16xf32> to vector<16x1xf32>
    %cst_32 = arith.constant 3.200000e+01 : f32
    %108 = vector.broadcast %cst_32 : f32 to vector<16x1xf32>
    %109 = arith.divf %107, %108 : vector<16x1xf32>
    %110 = vector.broadcast %109 : vector<16x1xf32> to vector<16x32xf32>
    %111 = arith.subf %103, %110 : vector<16x32xf32>
    %112 = arith.mulf %111, %111 : vector<16x32xf32>
    %cst_33 = arith.constant dense<0.000000e+00> : vector<16xf32>
    %113 = vector.multi_reduction <add>, %112, %cst_33 [1] : vector<16x32xf32> to vector<16xf32>
    %114 = vector.shape_cast %113 : vector<16xf32> to vector<16x1xf32>
    %cst_34 = arith.constant 3.200000e+01 : f32
    %115 = vector.broadcast %cst_34 : f32 to vector<16x1xf32>
    %116 = arith.divf %114, %115 : vector<16x1xf32>
    %117 = vector.broadcast %109 : vector<16x1xf32> to vector<16x32xf32>
    %118 = arith.subf %103, %117 : vector<16x32xf32>
    %cst_35 = arith.constant 9.99999996E-13 : f32
    %119 = vector.broadcast %cst_35 : f32 to vector<16x1xf32>
    %120 = arith.addf %116, %119 : vector<16x1xf32>
    %121 = math.rsqrt %120 : vector<16x1xf32>
    %122 = vector.broadcast %121 : vector<16x1xf32> to vector<16x32xf32>
    %123 = arith.mulf %118, %122 : vector<16x32xf32>
    %124 = vector.broadcast %104 : vector<1x32xf32> to vector<16x32xf32>
    %125 = arith.mulf %123, %124 : vector<16x32xf32>
    %126 = vector.broadcast %105 : vector<1x32xf32> to vector<16x32xf32>
    %127 = arith.addf %125, %126 : vector<16x32xf32>
    %c0_36 = arith.constant 0 : index
    %c0_37 = arith.constant 0 : index
    %128 = vector.load %arg9[%c0_36, %c0_37] : memref<16x32xf32, #tpu.memory_space<vmem>>, vector<16x32xf32>
    tpu.vector_store %arg9[%c0_36, %c0_37], %127 {strides = array<i32>} : memref<16x32xf32, #tpu.memory_space<vmem>>, vector<16x32xf32>,
    return
  }
  func.func @transform_0(%arg0: i32) -> (i32, i32) {
    %c0_i32 = arith.constant 0 : i32
    %c0_i32_0 = arith.constant 0 : i32
    %c0_i32_1 = arith.constant 0 : i32
    return %c0_i32, %c0_i32_0 : i32, i32
  }
  func.func @transform_1(%arg0: i32) -> (i32, i32) {
    %c0_i32 = arith.constant 0 : i32
    %c0_i32_0 = arith.constant 0 : i32
    %c0_i32_1 = arith.constant 0 : i32
    return %c0_i32, %c0_i32_0 : i32, i32
  }
  func.func @transform_2(%arg0: i32) -> (i32, i32) {
    %c0_i32 = arith.constant 0 : i32
    %c0_i32_0 = arith.constant 0 : i32
    %c0_i32_1 = arith.constant 0 : i32
    return %c0_i32, %c0_i32_0 : i32, i32
  }
  func.func @transform_3(%arg0: i32) -> (i32, i32) {
    %c0_i32 = arith.constant 0 : i32
    %c0_i32_0 = arith.constant 0 : i32
    %c0_i32_1 = arith.constant 0 : i32
    return %c0_i32, %c0_i32_0 : i32, i32
  }
  func.func @transform_4(%arg0: i32) -> (i32, i32) {
    %c0_i32 = arith.constant 0 : i32
    %c0_i32_0 = arith.constant 0 : i32
    %c0_i32_1 = arith.constant 0 : i32
    return %c0_i32, %c0_i32_0 : i32, i32
  }
  func.func @transform_5(%arg0: i32) -> (i32, i32) {
    %c0_i32 = arith.constant 0 : i32
    %c0_i32_0 = arith.constant 0 : i32
    %c0_i32_1 = arith.constant 0 : i32
    return %c0_i32, %c0_i32_0 : i32, i32
  }
  func.func @transform_6(%arg0: i32) -> (i32, i32) {
    %c0_i32 = arith.constant 0 : i32
    %c0_i32_0 = arith.constant 0 : i32
    %c0_i32_1 = arith.constant 0 : i32
    return %c0_i32, %c0_i32_0 : i32, i32
  }
  func.func @transform_7(%arg0: i32) -> (i32, i32) {
    %c0_i32 = arith.constant 0 : i32
    %c0_i32_0 = arith.constant 0 : i32
    %c0_i32_1 = arith.constant 0 : i32
    return %c0_i32, %c0_i32_0 : i32, i32
  }
  func.func @transform_8(%arg0: i32) -> (i32, i32) {
    %c0_i32 = arith.constant 0 : i32
    %c0_i32_0 = arith.constant 0 : i32
    %c0_i32_1 = arith.constant 0 : i32
    return %c0_i32, %c0_i32_0 : i32, i32
  }
}

</mosaic_0001>

<llo_original>
// kernel: tpu_custom_call.1
$region0: #{tpu_custom_call.1}
  #allocation0 [shape = 'u32[]', space=smem, size = 0x4, offset = 0x4, fixed_abs, tag = 'smem constant byte address 0x4 - core index']
  #allocation1 [shape = 'u32[72,128]{1,0:T(1,128)}', space=vmem, size = 0x9000, scoped, tag = 'internal scratch']
  %s0 = inlined_call_operand.vmem [shape: f32[16,32], index: 0, kind: input, shape index: {}]
  %s1 = inlined_call_operand.hbm [shape: f32[8,8], index: 1, kind: input, shape index: {}]
  %s2 = inlined_call_operand.vmem [shape: bf16[32,96], index: 2, kind: input, shape index: {}]
  %s3 = inlined_call_operand.vmem [shape: bf16[32,32], index: 3, kind: input, shape index: {}]
  %s4 = inlined_call_operand.hbm [shape: bf16[32,64], index: 4, kind: input, shape index: {}]
  %s5 = inlined_call_operand.vmem [shape: bf16[64,32], index: 5, kind: input, shape index: {}]
  %s6 = inlined_call_operand.vmem [shape: f32[1,64], index: 6, kind: input, shape index: {}]
  %s7 = inlined_call_operand.hbm [shape: f32[9,32], index: 7, kind: input, shape index: {}]
  %s8 = inlined_call_operand.hbm [shape: f32[16,32], index: 8, kind: output, shape index: {}]
  %s9 = sld [smem:[#allocation0]]
  $region54: #{tpu_custom_call.1} parent=0
    _
  %s11 = ssub.s32 1, %s9
  %s12 = scalar_select 0, %s11, %s9
  $region1: #{tpu_custom_call.1} parent=0
    #allocation2 [shape = 'u8[4096]{0}', space=vmem, size = 0x1000, scoped, tag = 'input window, operand 1, single buffered']
    #allocation3 [shape = 's32[1]{0}', space=sflag, size = 0x4, scoped, tag = 'scoped memory for tpu_custom_call.1']
    #allocation4 [shape = 's32[1]{0}', space=sflag, size = 0x4, scoped, tag = 'scoped memory for tpu_custom_call.1']
    #allocation5 [shape = 'u8[8192]{0}', space=vmem, size = 0x2000, scoped, tag = 'input window, operand 4, single buffered']
    #allocation6 [shape = 's32[1]{0}', space=sflag, size = 0x4, scoped, tag = 'scoped memory for tpu_custom_call.1']
    #allocation7 [shape = 'u8[8192]{0}', space=vmem, size = 0x2000, scoped, tag = 'input window, operand 7, single buffered']
    #allocation8 [shape = 'u8[8192]{0}', space=vmem, size = 0x2000, scoped, tag = 'output window, operand 0, single buffered']
    %13 = vsyncpa [#allocation3], 0
    %14 = vsyncpa [#allocation6], 0
    %15 = vsyncpa [#allocation4], 0
    // Predicated region
    $region2: #{tpu_custom_call.1} parent=1 // pred_check
      _
    $region3: #{tpu_custom_call.1} parent=1 // pred_check_branch
      %17 = sbr.rel (0) target = $region5
    $region4: #{tpu_custom_call.1} parent=1 // pred_region
      _
    $region5: #{tpu_custom_call.1} parent=1 // pred_fallthru
      _
    // Predicated region
    $region6: #{tpu_custom_call.1} parent=1 // pred_check
      _
    $region7: #{tpu_custom_call.1} parent=1 // pred_check_branch
      %19 = sbr.rel (0) target = $region9
    $region8: #{tpu_custom_call.1} parent=1 // pred_region
      %21 = vsyncadd [#allocation3], 0
      %s23 = sshll.u32 %s1, 4
      %s24 = int_to_ptr.hbm [resolvable:$true] %s23
      %s25 = sshll.u32 [#allocation2], 4
      %s26 = int_to_ptr.vmem [resolvable:$true] %s25
      %28 = dma.hbm_to_vmem [thread:$0]  %s24, 128, %s26, [#allocation3]
    $region9: #{tpu_custom_call.1} parent=1 // pred_fallthru
      _
    // Predicated region
    $region10: #{tpu_custom_call.1} parent=1 // pred_check
      _
    $region11: #{tpu_custom_call.1} parent=1 // pred_check_branch
      %30 = sbr.rel (0) target = $region13
    $region12: #{tpu_custom_call.1} parent=1 // pred_region
      _
    $region13: #{tpu_custom_call.1} parent=1 // pred_fallthru
      _
    // Predicated region
    $region14: #{tpu_custom_call.1} parent=1 // pred_check
      _
    $region15: #{tpu_custom_call.1} parent=1 // pred_check_branch
      %32 = sbr.rel (0) target = $region17
    $region16: #{tpu_custom_call.1} parent=1 // pred_region
      _
    $region17: #{tpu_custom_call.1} parent=1 // pred_fallthru
      _
    // Predicated region
    $region18: #{tpu_custom_call.1} parent=1 // pred_check
      _
    $region19: #{tpu_custom_call.1} parent=1 // pred_check_branch
      %34 = sbr.rel (0) target = $region21
    $region20: #{tpu_custom_call.1} parent=1 // pred_region
      %36 = vsyncadd [#allocation6], 0
      %s37 = sshll.u32 %s4, 4
      %s38 = int_to_ptr.hbm [resolvable:$true] %s37
      %s39 = sshll.u32 [#allocation5], 4
      %s40 = int_to_ptr.vmem [resolvable:$true] %s39
      %45 = dma.hbm_to_vmem [thread:$0]  %s38, 256, %s40, [#allocation6], 64, 64, 4
    $region21: #{tpu_custom_call.1} parent=1 // pred_fallthru
      _
    // Predicated region
    $region22: #{tpu_custom_call.1} parent=1 // pred_check
      _
    $region23: #{tpu_custom_call.1} parent=1 // pred_check_branch
      %47 = sbr.rel (0) target = $region25
    $region24: #{tpu_custom_call.1} parent=1 // pred_region
      _
    $region25: #{tpu_custom_call.1} parent=1 // pred_fallthru
      _
    // Predicated region
    $region26: #{tpu_custom_call.1} parent=1 // pred_check
      _
    $region27: #{tpu_custom_call.1} parent=1 // pred_check_branch
      %49 = sbr.rel (0) target = $region29
    $region28: #{tpu_custom_call.1} parent=1 // pred_region
      _
    $region29: #{tpu_custom_call.1} parent=1 // pred_fallthru
      _
    // Predicated region
    $region30: #{tpu_custom_call.1} parent=1 // pred_check
      _
    $region31: #{tpu_custom_call.1} parent=1 // pred_check_branch
      %51 = sbr.rel (0) target = $region33
    $region32: #{tpu_custom_call.1} parent=1 // pred_region
      %53 = vsyncadd [#allocation6], 0
      %s54 = sshll.u32 %s7, 4
      %s55 = int_to_ptr.hbm [resolvable:$true] %s54
      %s56 = sshll.u32 [#allocation7], 4
      %s57 = int_to_ptr.vmem [resolvable:$true] %s56
      %62 = dma.hbm_to_vmem [thread:$0]  %s55, 256, %s57, [#allocation6], 128, 128, 8
    $region33: #{tpu_custom_call.1} parent=1 // pred_fallthru
      _
    // Predicated region
    $region34: #{tpu_custom_call.1} parent=1 // pred_check
      _
    $region35: #{tpu_custom_call.1} parent=1 // pred_check_branch
      %64 = sbr.rel (0) target = $region37
    $region36: #{tpu_custom_call.1} parent=1 // pred_region
      %66 = dma.done [#allocation3], 128
    $region37: #{tpu_custom_call.1} parent=1 // pred_fallthru
      _
    // Predicated region
    $region38: #{tpu_custom_call.1} parent=1 // pred_check
      _
    $region39: #{tpu_custom_call.1} parent=1 // pred_check_branch
      %68 = sbr.rel (0) target = $region41
    $region40: #{tpu_custom_call.1} parent=1 // pred_region
      %70 = dma.done [#allocation6], 256
    $region41: #{tpu_custom_call.1} parent=1 // pred_fallthru
      _
    // Predicated region
    $region42: #{tpu_custom_call.1} parent=1 // pred_check
      _
    $region43: #{tpu_custom_call.1} parent=1 // pred_check_branch
      %72 = sbr.rel (0) target = $region45
    $region44: #{tpu_custom_call.1} parent=1 // pred_region
      %74 = dma.done [#allocation6], 256
    $region45: #{tpu_custom_call.1} parent=1 // pred_fallthru
      _
    %v76 = vld [vmem:[%s0] sm:$0xff]
    %v77 = vld [vmem:[%s0 + $0x8] sm:$0xff]
    %v78 = vpack.c.bf16 %v77, %v76
    %v79 = vld [vmem:[#allocation7] sm:$0xff]
    %v80 = vld [vmem:[#allocation7 + $0x8] sm:$0x1]
    %v81 = vld [vmem:[%s2] sm:$0xf]
    %v82 = vld [vmem:[%s2 + $0x4] sm:$0xf]
    %v83 = vld [vmem:[%s2 + $0x8] sm:$0xf]
    %v84 = vld [vmem:[%s2 + $0xc] sm:$0xf]
    %v89 = vunpack.c.l.b16 %v81
    %v90 = vunpack.c.l.b16 %v82
    %v91 = vunpack.c.l.b16 %v83
    %v92 = vunpack.c.l.b16 %v84
    %v93 = vpack.c.b16 %v90, %v89
    %v94 = vpack.c.b16 %v92, %v91
    %vm97 = vcmask 261120
    %v99 = vsel %vm97, %v78, 0
    %101 = vmatpush.bf16.msra.mxu0 0
    %102 = vmatpush.bf16.msra.mxu0 0
    %103 = vmatpush.bf16.msra.mxu0 0
    %104 = vmatpush.bf16.msra.mxu0 0
    %105 = vmatpush.bf16.msra.mxu0 0
    %106 = vmatpush.bf16.msra.mxu0 0
    %107 = vmatpush.bf16.msra.mxu0 %v94
    %108 = vmatpush.bf16.msra.mxu0 %v93
    %109 = vmatmul.bf16.gmra.mxu0 %v99
    %v110 = vpop.f32.mrf.mxu0
    %v111 = vadd.f32 0.0, %v110
    %v112 = vpop.f32.mrf.mxu0
    %v113 = vadd.f32 0.0, %v112
    %114 = vdwg.mxu0
    %v115 = vperm.slane %v79, 0
    %v116 = vadd.f32 %v111, %v115
    %v117 = vadd.f32 %v113, %v115
    %v118 = vpack.c.bf16 %v116, %v116
    %v119 = vpack.c.bf16 %v117, %v117
    %v120 = vperm.slane %v79, 1
    %122 = vrot.lane.b32.xlu0 %v120, 32
    %v123 = vpop.permute.xlu0 %122
    %v125 = vadd.f32 %v111, %v123
    %v126 = vadd.f32 %v113, %v123
    %v127 = vpack.c.bf16 %v125, %v125
    %v128 = vpack.c.bf16 %v126, %v126
    %v129 = vperm.slane %v79, 2
    %131 = vrot.lane.b32.xlu0 %v129, 64
    %v132 = vpop.permute.xlu0 %131
    %v134 = vadd.f32 %v111, %v132
    %v135 = vadd.f32 %v113, %v132
    %v136 = vpack.c.bf16 %v134, %v134
    %v137 = vpack.c.bf16 %v135, %v135
    %140 = vrot.lane.b32.xlu0 %v118, 120
    %v141 = vpop.permute.xlu0 %140
    %142 = vrot.lane.b32.xlu0 %v119, 120
    %v143 = vpop.permute.xlu0 %142
    %144 = vrot.lane.b32.xlu0 %v118, 112
    %v145 = vpop.permute.xlu0 %144
    %146 = vrot.lane.b32.xlu0 %v119, 112
    %v147 = vpop.permute.xlu0 %146
    %148 = vrot.lane.b32.xlu0 %v118, 104
    %v149 = vpop.permute.xlu0 %148
    %150 = vrot.lane.b32.xlu0 %v119, 104
    %v151 = vpop.permute.xlu0 %150
    %v154 = vpack.i.b16 %v141, %v118
    %v155 = vshrl.u32 %v118, 16
    %v156 = vshrl.u32 %v141, 16
    %v157 = vpack.i.b16 %v156, %v155
    %v160 = vpack.i.b16 %v149, %v145
    %v161 = vshrl.u32 %v145, 16
    %v162 = vshrl.u32 %v149, 16
    %v163 = vpack.i.b16 %v162, %v161
    %v166 = vpack.i.b16 %v143, %v119
    %v167 = vshrl.u32 %v119, 16
    %v168 = vshrl.u32 %v143, 16
    %v169 = vpack.i.b16 %v168, %v167
    %v172 = vpack.i.b16 %v151, %v147
    %v173 = vshrl.u32 %v147, 16
    %v174 = vshrl.u32 %v151, 16
    %v175 = vpack.i.b16 %v174, %v173
    %v178 = vunpack.c.l.s4 1983009808
    %v179 = vunpack.c.0.s8 %v178
    %v180 = vperm.slane %v154, %v179
    %v183 = vunpack.c.l.s4 1983009808
    %v184 = vunpack.c.0.s8 %v183
    %v185 = vperm.slane %v160, %v184
    %v186 = vrot.slane %v185, 4
    %vm187 = vcmask 1047556
    %v188 = vsel %vm187, %v186, %v180
    %v189 = vrot.slane %v180, 4
    %v190 = vsel %vm187, %v185, %v189
    %v192 = vunpack.c.l.s4 1934713408
    %v193 = vunpack.c.0.s8 %v192
    %v194 = vperm.slane %v188, %v193
    %v196 = vunpack.c.l.s4 1934713408
    %v197 = vunpack.c.0.s8 %v196
    %v198 = vperm.slane %v190, %v197
    %v199 = vrot.slane %v194, 4
    %v200 = vsel %vm187, 0, %v199
    %v201 = vrot.slane %v198, 4
    %v202 = vsel %vm187, 0, %v201
    %v205 = vunpack.c.l.s4 1983009808
    %v206 = vunpack.c.0.s8 %v205
    %v207 = vperm.slane %v157, %v206
    %v210 = vunpack.c.l.s4 1983009808
    %v211 = vunpack.c.0.s8 %v210
    %v212 = vperm.slane %v163, %v211
    %v213 = vrot.slane %v212, 4
    %v214 = vsel %vm187, %v213, %v207
    %v215 = vrot.slane %v207, 4
    %v216 = vsel %vm187, %v212, %v215
    %v218 = vunpack.c.l.s4 1934713408
    %v219 = vunpack.c.0.s8 %v218
    %v220 = vperm.slane %v214, %v219
    %v222 = vunpack.c.l.s4 1934713408
    %v223 = vunpack.c.0.s8 %v222
    %v224 = vperm.slane %v216, %v223
    %v225 = vrot.slane %v220, 4
    %v226 = vsel %vm187, 0, %v225
    %v227 = vrot.slane %v224, 4
    %v228 = vsel %vm187, 0, %v227
    %v231 = vunpack.c.l.s4 1983009808
    %v232 = vunpack.c.0.s8 %v231
    %v233 = vperm.slane %v166, %v232
    %v236 = vunpack.c.l.s4 1983009808
    %v237 = vunpack.c.0.s8 %v236
    %v238 = vperm.slane %v172, %v237
    %v239 = vrot.slane %v238, 4
    %v240 = vsel %vm187, %v239, %v233
    %v241 = vrot.slane %v233, 4
    %v242 = vsel %vm187, %v238, %v241
    %v244 = vunpack.c.l.s4 1934713408
    %v245 = vunpack.c.0.s8 %v244
    %v246 = vperm.slane %v240, %v245
    %v248 = vunpack.c.l.s4 1934713408
    %v249 = vunpack.c.0.s8 %v248
    %v250 = vperm.slane %v242, %v249
    %v251 = vrot.slane %v246, 4
    %v252 = vsel %vm187, 0, %v251
    %v253 = vrot.slane %v250, 4
    %v254 = vsel %vm187, 0, %v253
    %v257 = vunpack.c.l.s4 1983009808
    %v258 = vunpack.c.0.s8 %v257
    %v259 = vperm.slane %v169, %v258
    %v262 = vunpack.c.l.s4 1983009808
    %v263 = vunpack.c.0.s8 %v262
    %v264 = vperm.slane %v175, %v263
    %v265 = vrot.slane %v264, 4
    %v266 = vsel %vm187, %v265, %v259
    %v267 = vrot.slane %v259, 4
    %v268 = vsel %vm187, %v264, %v267
    %v270 = vunpack.c.l.s4 1934713408
    %v271 = vunpack.c.0.s8 %v270
    %v272 = vperm.slane %v266, %v271
    %v274 = vunpack.c.l.s4 1934713408
    %v275 = vunpack.c.0.s8 %v274
    %v276 = vperm.slane %v268, %v275
    %v277 = vrot.slane %v272, 4
    %v278 = vsel %vm187, 0, %v277
    %v279 = vrot.slane %v276, 4
    %v280 = vsel %vm187, 0, %v279
    %v281 = vsel %vm187, %v201, %v194
    %v283 = vunpack.c.l.s4 1983009808
    %v284 = vunpack.c.0.s8 %v283
    %v285 = vperm.slane %v281, %v284
    %v286 = vrot.slane %v202, 4
    %v287 = vsel %vm187, %v286, %v200
    %v289 = vunpack.c.l.s4 1983009808
    %v290 = vunpack.c.0.s8 %v289
    %v291 = vperm.slane %v287, %v290
    %v292 = vrot.slane %v291, 4
    %v293 = vsel %vm187, %v292, %v285
    %v295 = vunpack.c.l.s4 1934713408
    %v296 = vunpack.c.0.s8 %v295
    %v297 = vperm.slane %v293, %v296
    %v298 = vrot.slane %v297, 4
    %v299 = vsel %vm187, 0, %v298
    %v300 = vsel %vm187, %v227, %v220
    %v302 = vunpack.c.l.s4 1983009808
    %v303 = vunpack.c.0.s8 %v302
    %v304 = vperm.slane %v300, %v303
    %v305 = vrot.slane %v228, 4
    %v306 = vsel %vm187, %v305, %v226
    %v308 = vunpack.c.l.s4 1983009808
    %v309 = vunpack.c.0.s8 %v308
    %v310 = vperm.slane %v306, %v309
    %v311 = vrot.slane %v310, 4
    %v312 = vsel %vm187, %v311, %v304
    %v314 = vunpack.c.l.s4 1934713408
    %v315 = vunpack.c.0.s8 %v314
    %v316 = vperm.slane %v312, %v315
    %v317 = vrot.slane %v316, 4
    %v318 = vsel %vm187, 0, %v317
    %v319 = vsel %vm187, %v253, %v246
    %v321 = vunpack.c.l.s4 1983009808
    %v322 = vunpack.c.0.s8 %v321
    %v323 = vperm.slane %v319, %v322
    %v324 = vrot.slane %v254, 4
    %v325 = vsel %vm187, %v324, %v252
    %v327 = vunpack.c.l.s4 1983009808
    %v328 = vunpack.c.0.s8 %v327
    %v329 = vperm.slane %v325, %v328
    %v330 = vrot.slane %v329, 4
    %v331 = vsel %vm187, %v330, %v323
    %v333 = vunpack.c.l.s4 1934713408
    %v334 = vunpack.c.0.s8 %v333
    %v335 = vperm.slane %v331, %v334
    %v336 = vrot.slane %v335, 4
    %v337 = vsel %vm187, 0, %v336
    %v338 = vsel %vm187, %v279, %v272
    %v340 = vunpack.c.l.s4 1983009808
    %v341 = vunpack.c.0.s8 %v340
    %v342 = vperm.slane %v338, %v341
    %v343 = vrot.slane %v280, 4
    %v344 = vsel %vm187, %v343, %v278
    %v346 = vunpack.c.l.s4 1983009808
    %v347 = vunpack.c.0.s8 %v346
    %v348 = vperm.slane %v344, %v347
    %v349 = vrot.slane %v348, 4
    %v350 = vsel %vm187, %v349, %v342
    %v352 = vunpack.c.l.s4 1934713408
    %v353 = vunpack.c.0.s8 %v352
    %v354 = vperm.slane %v350, %v353
    %v355 = vrot.slane %v354, 4
    %v356 = vsel %vm187, 0, %v355
    %v359 = vpack.i.b16 %v316, %v297
    %v360 = vshrl.u32 %v297, 16
    %v361 = vshrl.u32 %v316, 16
    %v362 = vpack.i.b16 %v361, %v360
    %v365 = vpack.i.b16 %v318, %v299
    %v366 = vshrl.u32 %v299, 16
    %v367 = vshrl.u32 %v318, 16
    %v368 = vpack.i.b16 %v367, %v366
    %v371 = vpack.i.b16 %v354, %v335
    %v372 = vshrl.u32 %v335, 16
    %v373 = vshrl.u32 %v354, 16
    %v374 = vpack.i.b16 %v373, %v372
    %v377 = vpack.i.b16 %v356, %v337
    %v378 = vshrl.u32 %v337, 16
    %v379 = vshrl.u32 %v356, 16
    %v380 = vpack.i.b16 %v379, %v378
    %383 = vrot.lane.b32.xlu0 %v127, 120
    %v384 = vpop.permute.xlu0 %383
    %385 = vrot.lane.b32.xlu0 %v128, 120
    %v386 = vpop.permute.xlu0 %385
    %387 = vrot.lane.b32.xlu0 %v127, 112
    %v388 = vpop.permute.xlu0 %387
    %389 = vrot.lane.b32.xlu0 %v128, 112
    %v390 = vpop.permute.xlu0 %389
    %391 = vrot.lane.b32.xlu0 %v127, 104
    %v392 = vpop.permute.xlu0 %391
    %393 = vrot.lane.b32.xlu0 %v128, 104
    %v394 = vpop.permute.xlu0 %393
    %395 = vrot.lane.b32.xlu0 %v127, 96
    %v396 = vpop.permute.xlu0 %395
    %397 = vrot.lane.b32.xlu0 %v128, 96
    %v398 = vpop.permute.xlu0 %397
    %399 = vrot.lane.b32.xlu0 %v384, 96
    %v400 = vpop.permute.xlu0 %399
    %401 = vrot.lane.b32.xlu0 %v386, 96
    %v402 = vpop.permute.xlu0 %401
    %403 = vrot.lane.b32.xlu0 %v388, 96
    %v404 = vpop.permute.xlu0 %403
    %405 = vrot.lane.b32.xlu0 %v390, 96
    %v406 = vpop.permute.xlu0 %405
    %407 = vrot.lane.b32.xlu0 %v392, 96
    %v408 = vpop.permute.xlu0 %407
    %409 = vrot.lane.b32.xlu0 %v394, 96
    %v410 = vpop.permute.xlu0 %409
    %v413 = vpack.i.b16 %v400, %v396
    %v414 = vshrl.u32 %v396, 16
    %v415 = vshrl.u32 %v400, 16
    %v416 = vpack.i.b16 %v415, %v414
    %v419 = vpack.i.b16 %v408, %v404
    %v420 = vshrl.u32 %v404, 16
    %v421 = vshrl.u32 %v408, 16
    %v422 = vpack.i.b16 %v421, %v420
    %v425 = vpack.i.b16 %v402, %v398
    %v426 = vshrl.u32 %v398, 16
    %v427 = vshrl.u32 %v402, 16
    %v428 = vpack.i.b16 %v427, %v426
    %v431 = vpack.i.b16 %v410, %v406
    %v432 = vshrl.u32 %v406, 16
    %v433 = vshrl.u32 %v410, 16
    %v434 = vpack.i.b16 %v433, %v432
    %v437 = vunpack.c.l.s4 1983009808
    %v438 = vunpack.c.0.s8 %v437
    %v439 = vperm.slane %v413, %v438
    %v442 = vunpack.c.l.s4 1983009808
    %v443 = vunpack.c.0.s8 %v442
    %v444 = vperm.slane %v419, %v443
    %v445 = vrot.slane %v444, 4
    %v446 = vsel %vm187, %v445, %v439
    %v447 = vrot.slane %v439, 4
    %v448 = vsel %vm187, %v444, %v447
    %v450 = vunpack.c.l.s4 1934713408
    %v451 = vunpack.c.0.s8 %v450
    %v452 = vperm.slane %v446, %v451
    %v454 = vunpack.c.l.s4 1934713408
    %v455 = vunpack.c.0.s8 %v454
    %v456 = vperm.slane %v448, %v455
    %v457 = vrot.slane %v452, 4
    %v458 = vsel %vm187, 0, %v457
    %v459 = vrot.slane %v456, 4
    %v460 = vsel %vm187, 0, %v459
    %v463 = vunpack.c.l.s4 1983009808
    %v464 = vunpack.c.0.s8 %v463
    %v465 = vperm.slane %v416, %v464
    %v468 = vunpack.c.l.s4 1983009808
    %v469 = vunpack.c.0.s8 %v468
    %v470 = vperm.slane %v422, %v469
    %v471 = vrot.slane %v470, 4
    %v472 = vsel %vm187, %v471, %v465
    %v473 = vrot.slane %v465, 4
    %v474 = vsel %vm187, %v470, %v473
    %v476 = vunpack.c.l.s4 1934713408
    %v477 = vunpack.c.0.s8 %v476
    %v478 = vperm.slane %v472, %v477
    %v480 = vunpack.c.l.s4 1934713408
    %v481 = vunpack.c.0.s8 %v480
    %v482 = vperm.slane %v474, %v481
    %v483 = vrot.slane %v478, 4
    %v484 = vsel %vm187, 0, %v483
    %v485 = vrot.slane %v482, 4
    %v486 = vsel %vm187, 0, %v485
    %v489 = vunpack.c.l.s4 1983009808
    %v490 = vunpack.c.0.s8 %v489
    %v491 = vperm.slane %v425, %v490
    %v494 = vunpack.c.l.s4 1983009808
    %v495 = vunpack.c.0.s8 %v494
    %v496 = vperm.slane %v431, %v495
    %v497 = vrot.slane %v496, 4
    %v498 = vsel %vm187, %v497, %v491
    %v499 = vrot.slane %v491, 4
    %v500 = vsel %vm187, %v496, %v499
    %v502 = vunpack.c.l.s4 1934713408
    %v503 = vunpack.c.0.s8 %v502
    %v504 = vperm.slane %v498, %v503
    %v506 = vunpack.c.l.s4 1934713408
    %v507 = vunpack.c.0.s8 %v506
    %v508 = vperm.slane %v500, %v507
    %v509 = vrot.slane %v504, 4
    %v510 = vsel %vm187, 0, %v509
    %v511 = vrot.slane %v508, 4
    %v512 = vsel %vm187, 0, %v511
    %v515 = vunpack.c.l.s4 1983009808
    %v516 = vunpack.c.0.s8 %v515
    %v517 = vperm.slane %v428, %v516
    %v520 = vunpack.c.l.s4 1983009808
    %v521 = vunpack.c.0.s8 %v520
    %v522 = vperm.slane %v434, %v521
    %v523 = vrot.slane %v522, 4
    %v524 = vsel %vm187, %v523, %v517
    %v525 = vrot.slane %v517, 4
    %v526 = vsel %vm187, %v522, %v525
    %v528 = vunpack.c.l.s4 1934713408
    %v529 = vunpack.c.0.s8 %v528
    %v530 = vperm.slane %v524, %v529
    %v532 = vunpack.c.l.s4 1934713408
    %v533 = vunpack.c.0.s8 %v532
    %v534 = vperm.slane %v526, %v533
    %v535 = vrot.slane %v530, 4
    %v536 = vsel %vm187, 0, %v535
    %v537 = vrot.slane %v534, 4
    %v538 = vsel %vm187, 0, %v537
    %v539 = vsel %vm187, %v459, %v452
    %v541 = vunpack.c.l.s4 1983009808
    %v542 = vunpack.c.0.s8 %v541
    %v543 = vperm.slane %v539, %v542
    %v544 = vrot.slane %v460, 4
    %v545 = vsel %vm187, %v544, %v458
    %v547 = vunpack.c.l.s4 1983009808
    %v548 = vunpack.c.0.s8 %v547
    %v549 = vperm.slane %v545, %v548
    %v550 = vrot.slane %v549, 4
    %v551 = vsel %vm187, %v550, %v543
    %v553 = vunpack.c.l.s4 1934713408
    %v554 = vunpack.c.0.s8 %v553
    %v555 = vperm.slane %v551, %v554
    %v556 = vrot.slane %v555, 4
    %v557 = vsel %vm187, 0, %v556
    %v558 = vsel %vm187, %v485, %v478
    %v560 = vunpack.c.l.s4 1983009808
    %v561 = vunpack.c.0.s8 %v560
    %v562 = vperm.slane %v558, %v561
    %v563 = vrot.slane %v486, 4
    %v564 = vsel %vm187, %v563, %v484
    %v566 = vunpack.c.l.s4 1983009808
    %v567 = vunpack.c.0.s8 %v566
    %v568 = vperm.slane %v564, %v567
    %v569 = vrot.slane %v568, 4
    %v570 = vsel %vm187, %v569, %v562
    %v572 = vunpack.c.l.s4 1934713408
    %v573 = vunpack.c.0.s8 %v572
    %v574 = vperm.slane %v570, %v573
    %v575 = vrot.slane %v574, 4
    %v576 = vsel %vm187, 0, %v575
    %v577 = vsel %vm187, %v511, %v504
    %v579 = vunpack.c.l.s4 1983009808
    %v580 = vunpack.c.0.s8 %v579
    %v581 = vperm.slane %v577, %v580
    %v582 = vrot.slane %v512, 4
    %v583 = vsel %vm187, %v582, %v510
    %v585 = vunpack.c.l.s4 1983009808
    %v586 = vunpack.c.0.s8 %v585
    %v587 = vperm.slane %v583, %v586
    %v588 = vrot.slane %v587, 4
    %v589 = vsel %vm187, %v588, %v581
    %v591 = vunpack.c.l.s4 1934713408
    %v592 = vunpack.c.0.s8 %v591
    %v593 = vperm.slane %v589, %v592
    %v594 = vrot.slane %v593, 4
    %v595 = vsel %vm187, 0, %v594
    %v596 = vsel %vm187, %v537, %v530
    %v598 = vunpack.c.l.s4 1983009808
    %v599 = vunpack.c.0.s8 %v598
    %v600 = vperm.slane %v596, %v599
    %v601 = vrot.slane %v538, 4
    %v602 = vsel %vm187, %v601, %v536
    %v604 = vunpack.c.l.s4 1983009808
    %v605 = vunpack.c.0.s8 %v604
    %v606 = vperm.slane %v602, %v605
    %v607 = vrot.slane %v606, 4
    %v608 = vsel %vm187, %v607, %v600
    %v610 = vunpack.c.l.s4 1934713408
    %v611 = vunpack.c.0.s8 %v610
    %v612 = vperm.slane %v608, %v611
    %v613 = vrot.slane %v612, 4
    %v614 = vsel %vm187, 0, %v613
    %v617 = vpack.i.b16 %v574, %v555
    %v618 = vshrl.u32 %v555, 16
    %v619 = vshrl.u32 %v574, 16
    %v620 = vpack.i.b16 %v619, %v618
    %v623 = vpack.i.b16 %v576, %v557
    %v624 = vshrl.u32 %v557, 16
    %v625 = vshrl.u32 %v576, 16
    %v626 = vpack.i.b16 %v625, %v624
    %v629 = vpack.i.b16 %v612, %v593
    %v630 = vshrl.u32 %v593, 16
    %v631 = vshrl.u32 %v612, 16
    %v632 = vpack.i.b16 %v631, %v630
    %v635 = vpack.i.b16 %v614, %v595
    %v636 = vshrl.u32 %v595, 16
    %v637 = vshrl.u32 %v614, 16
    %v638 = vpack.i.b16 %v637, %v636
    %641 = vrot.lane.b32.xlu0 %v136, 120
    %v642 = vpop.permute.xlu0 %641
    %643 = vrot.lane.b32.xlu0 %v137, 120
    %v644 = vpop.permute.xlu0 %643
    %645 = vrot.lane.b32.xlu0 %v136, 112
    %v646 = vpop.permute.xlu0 %645
    %647 = vrot.lane.b32.xlu0 %v137, 112
    %v648 = vpop.permute.xlu0 %647
    %649 = vrot.lane.b32.xlu0 %v136, 104
    %v650 = vpop.permute.xlu0 %649
    %651 = vrot.lane.b32.xlu0 %v137, 104
    %v652 = vpop.permute.xlu0 %651
    %653 = vrot.lane.b32.xlu0 %v136, 64
    %v654 = vpop.permute.xlu0 %653
    %655 = vrot.lane.b32.xlu0 %v137, 64
    %v656 = vpop.permute.xlu0 %655
    %657 = vrot.lane.b32.xlu0 %v642, 64
    %v658 = vpop.permute.xlu0 %657
    %659 = vrot.lane.b32.xlu0 %v644, 64
    %v660 = vpop.permute.xlu0 %659
    %661 = vrot.lane.b32.xlu0 %v646, 64
    %v662 = vpop.permute.xlu0 %661
    %663 = vrot.lane.b32.xlu0 %v648, 64
    %v664 = vpop.permute.xlu0 %663
    %665 = vrot.lane.b32.xlu0 %v650, 64
    %v666 = vpop.permute.xlu0 %665
    %667 = vrot.lane.b32.xlu0 %v652, 64
    %v668 = vpop.permute.xlu0 %667
    %v671 = vpack.i.b16 %v658, %v654
    %v672 = vshrl.u32 %v654, 16
    %v673 = vshrl.u32 %v658, 16
    %v674 = vpack.i.b16 %v673, %v672
    %v677 = vpack.i.b16 %v666, %v662
    %v678 = vshrl.u32 %v662, 16
    %v679 = vshrl.u32 %v666, 16
    %v680 = vpack.i.b16 %v679, %v678
    %v683 = vpack.i.b16 %v660, %v656
    %v684 = vshrl.u32 %v656, 16
    %v685 = vshrl.u32 %v660, 16
    %v686 = vpack.i.b16 %v685, %v684
    %v689 = vpack.i.b16 %v668, %v664
    %v690 = vshrl.u32 %v664, 16
    %v691 = vshrl.u32 %v668, 16
    %v692 = vpack.i.b16 %v691, %v690
    %v695 = vunpack.c.l.s4 1983009808
    %v696 = vunpack.c.0.s8 %v695
    %v697 = vperm.slane %v671, %v696
    %v700 = vunpack.c.l.s4 1983009808
    %v701 = vunpack.c.0.s8 %v700
    %v702 = vperm.slane %v677, %v701
    %v703 = vrot.slane %v702, 4
    %v704 = vsel %vm187, %v703, %v697
    %v705 = vrot.slane %v697, 4
    %v706 = vsel %vm187, %v702, %v705
    %v708 = vunpack.c.l.s4 1934713408
    %v709 = vunpack.c.0.s8 %v708
    %v710 = vperm.slane %v704, %v709
    %v712 = vunpack.c.l.s4 1934713408
    %v713 = vunpack.c.0.s8 %v712
    %v714 = vperm.slane %v706, %v713
    %v715 = vrot.slane %v710, 4
    %v716 = vsel %vm187, 0, %v715
    %v717 = vrot.slane %v714, 4
    %v718 = vsel %vm187, 0, %v717
    %v721 = vunpack.c.l.s4 1983009808
    %v722 = vunpack.c.0.s8 %v721
    %v723 = vperm.slane %v674, %v722
    %v726 = vunpack.c.l.s4 1983009808
    %v727 = vunpack.c.0.s8 %v726
    %v728 = vperm.slane %v680, %v727
    %v729 = vrot.slane %v728, 4
    %v730 = vsel %vm187, %v729, %v723
    %v731 = vrot.slane %v723, 4
    %v732 = vsel %vm187, %v728, %v731
    %v734 = vunpack.c.l.s4 1934713408
    %v735 = vunpack.c.0.s8 %v734
    %v736 = vperm.slane %v730, %v735
    %v738 = vunpack.c.l.s4 1934713408
    %v739 = vunpack.c.0.s8 %v738
    %v740 = vperm.slane %v732, %v739
    %v741 = vrot.slane %v736, 4
    %v742 = vsel %vm187, 0, %v741
    %v743 = vrot.slane %v740, 4
    %v744 = vsel %vm187, 0, %v743
    %v747 = vunpack.c.l.s4 1983009808
    %v748 = vunpack.c.0.s8 %v747
    %v749 = vperm.slane %v683, %v748
    %v752 = vunpack.c.l.s4 1983009808
    %v753 = vunpack.c.0.s8 %v752
    %v754 = vperm.slane %v689, %v753
    %v755 = vrot.slane %v754, 4
    %v756 = vsel %vm187, %v755, %v749
    %v757 = vrot.slane %v749, 4
    %v758 = vsel %vm187, %v754, %v757
    %v760 = vunpack.c.l.s4 1934713408
    %v761 = vunpack.c.0.s8 %v760
    %v762 = vperm.slane %v756, %v761
    %v764 = vunpack.c.l.s4 1934713408
    %v765 = vunpack.c.0.s8 %v764
    %v766 = vperm.slane %v758, %v765
    %v767 = vrot.slane %v762, 4
    %v768 = vsel %vm187, 0, %v767
    %v769 = vrot.slane %v766, 4
    %v770 = vsel %vm187, 0, %v769
    %v773 = vunpack.c.l.s4 1983009808
    %v774 = vunpack.c.0.s8 %v773
    %v775 = vperm.slane %v686, %v774
    %v778 = vunpack.c.l.s4 1983009808
    %v779 = vunpack.c.0.s8 %v778
    %v780 = vperm.slane %v692, %v779
    %v781 = vrot.slane %v780, 4
    %v782 = vsel %vm187, %v781, %v775
    %v783 = vrot.slane %v775, 4
    %v784 = vsel %vm187, %v780, %v783
    %v786 = vunpack.c.l.s4 1934713408
    %v787 = vunpack.c.0.s8 %v786
    %v788 = vperm.slane %v782, %v787
    %v790 = vunpack.c.l.s4 1934713408
    %v791 = vunpack.c.0.s8 %v790
    %v792 = vperm.slane %v784, %v791
    %v793 = vrot.slane %v788, 4
    %v794 = vsel %vm187, 0, %v793
    %v795 = vrot.slane %v792, 4
    %v796 = vsel %vm187, 0, %v795
    %v797 = vsel %vm187, %v717, %v710
    %v799 = vunpack.c.l.s4 1983009808
    %v800 = vunpack.c.0.s8 %v799
    %v801 = vperm.slane %v797, %v800
    %v802 = vrot.slane %v718, 4
    %v803 = vsel %vm187, %v802, %v716
    %v805 = vunpack.c.l.s4 1983009808
    %v806 = vunpack.c.0.s8 %v805
    %v807 = vperm.slane %v803, %v806
    %v808 = vrot.slane %v807, 4
    %v809 = vsel %vm187, %v808, %v801
    %v811 = vunpack.c.l.s4 1934713408
    %v812 = vunpack.c.0.s8 %v811
    %v813 = vperm.slane %v809, %v812
    %v814 = vrot.slane %v813, 4
    %v815 = vsel %vm187, 0, %v814
    %v816 = vsel %vm187, %v743, %v736
    %v818 = vunpack.c.l.s4 1983009808
    %v819 = vunpack.c.0.s8 %v818
    %v820 = vperm.slane %v816, %v819
    %v821 = vrot.slane %v744, 4
    %v822 = vsel %vm187, %v821, %v742
    %v824 = vunpack.c.l.s4 1983009808
    %v825 = vunpack.c.0.s8 %v824
    %v826 = vperm.slane %v822, %v825
    %v827 = vrot.slane %v826, 4
    %v828 = vsel %vm187, %v827, %v820
    %v830 = vunpack.c.l.s4 1934713408
    %v831 = vunpack.c.0.s8 %v830
    %v832 = vperm.slane %v828, %v831
    %v833 = vrot.slane %v832, 4
    %v834 = vsel %vm187, 0, %v833
    %v835 = vsel %vm187, %v769, %v762
    %v837 = vunpack.c.l.s4 1983009808
    %v838 = vunpack.c.0.s8 %v837
    %v839 = vperm.slane %v835, %v838
    %v840 = vrot.slane %v770, 4
    %v841 = vsel %vm187, %v840, %v768
    %v843 = vunpack.c.l.s4 1983009808
    %v844 = vunpack.c.0.s8 %v843
    %v845 = vperm.slane %v841, %v844
    %v846 = vrot.slane %v845, 4
    %v847 = vsel %vm187, %v846, %v839
    %v849 = vunpack.c.l.s4 1934713408
    %v850 = vunpack.c.0.s8 %v849
    %v851 = vperm.slane %v847, %v850
    %v852 = vrot.slane %v851, 4
    %v853 = vsel %vm187, 0, %v852
    %v854 = vsel %vm187, %v795, %v788
    %v856 = vunpack.c.l.s4 1983009808
    %v857 = vunpack.c.0.s8 %v856
    %v858 = vperm.slane %v854, %v857
    %v859 = vrot.slane %v796, 4
    %v860 = vsel %vm187, %v859, %v794
    %v862 = vunpack.c.l.s4 1983009808
    %v863 = vunpack.c.0.s8 %v862
    %v864 = vperm.slane %v860, %v863
    %v865 = vrot.slane %v864, 4
    %v866 = vsel %vm187, %v865, %v858
    %v868 = vunpack.c.l.s4 1934713408
    %v869 = vunpack.c.0.s8 %v868
    %v870 = vperm.slane %v866, %v869
    %v871 = vrot.slane %v870, 4
    %v872 = vsel %vm187, 0, %v871
    %v875 = vpack.i.b16 %v832, %v813
    %v876 = vshrl.u32 %v813, 16
    %v877 = vshrl.u32 %v832, 16
    %v878 = vpack.i.b16 %v877, %v876
    %v881 = vpack.i.b16 %v834, %v815
    %v882 = vshrl.u32 %v815, 16
    %v883 = vshrl.u32 %v834, 16
    %v884 = vpack.i.b16 %v883, %v882
    %v887 = vpack.i.b16 %v870, %v851
    %v888 = vshrl.u32 %v851, 16
    %v889 = vshrl.u32 %v870, 16
    %v890 = vpack.i.b16 %v889, %v888
    %v893 = vpack.i.b16 %v872, %v853
    %v894 = vshrl.u32 %v853, 16
    %v895 = vshrl.u32 %v872, 16
    %v896 = vpack.i.b16 %v895, %v894
    %vm897 = vcmask 64512
    %v899 = vsel %vm897, %v359, 0
    %v902 = vsel %vm897, %v617, 0
    %904 = vmatpush.bf16.xpose.msra.mxu0 0
    %905 = vmatpush.bf16.xpose.msra.mxu0 0
    %906 = vmatpush.bf16.xpose.msra.mxu0 0
    %907 = vmatpush.bf16.xpose.msra.mxu0 0
    %908 = vmatpush.bf16.xpose.msra.mxu0 0
    %909 = vmatpush.bf16.xpose.msra.mxu0 0
    %910 = vmatpush.bf16.xpose.msra.mxu0 0
    %911 = vmatpush.bf16.xpose.msra.mxu0 %v902
    %912 = vmatmul.bf16.gmra.mxu0 %v899
    %v913 = vpop.f32.mrf.mxu0
    %v914 = vadd.f32 0.0, %v913
    %v915 = vpop.f32.mrf.mxu0
    %916 = vdwg.mxu0
    %v918 = vsel %vm897, %v362, 0
    %v921 = vsel %vm897, %v620, 0
    %923 = vmatpush.bf16.xpose.msra.mxu0 0
    %924 = vmatpush.bf16.xpose.msra.mxu0 0
    %925 = vmatpush.bf16.xpose.msra.mxu0 0
    %926 = vmatpush.bf16.xpose.msra.mxu0 0
    %927 = vmatpush.bf16.xpose.msra.mxu0 0
    %928 = vmatpush.bf16.xpose.msra.mxu0 0
    %929 = vmatpush.bf16.xpose.msra.mxu0 0
    %930 = vmatpush.bf16.xpose.msra.mxu0 %v921
    %931 = vmatmul.bf16.gmra.mxu0 %v918
    %v932 = vpop.f32.mrf.mxu0
    %v933 = vadd.f32 0.0, %v932
    %v934 = vpop.f32.mrf.mxu0
    %935 = vdwg.mxu0
    %v937 = vsel %vm897, %v365, 0
    %v940 = vsel %vm897, %v623, 0
    %942 = vmatpush.bf16.xpose.msra.mxu0 0
    %943 = vmatpush.bf16.xpose.msra.mxu0 0
    %944 = vmatpush.bf16.xpose.msra.mxu0 0
    %945 = vmatpush.bf16.xpose.msra.mxu0 0
    %946 = vmatpush.bf16.xpose.msra.mxu0 0
    %947 = vmatpush.bf16.xpose.msra.mxu0 0
    %948 = vmatpush.bf16.xpose.msra.mxu0 0
    %949 = vmatpush.bf16.xpose.msra.mxu0 %v940
    %950 = vmatmul.bf16.gmra.mxu0 %v937
    %v951 = vpop.f32.mrf.mxu0
    %v952 = vadd.f32 0.0, %v951
    %v953 = vpop.f32.mrf.mxu0
    %954 = vdwg.mxu0
    %v956 = vsel %vm897, %v368, 0
    %v959 = vsel %vm897, %v626, 0
    %961 = vmatpush.bf16.xpose.msra.mxu0 0
    %962 = vmatpush.bf16.xpose.msra.mxu0 0
    %963 = vmatpush.bf16.xpose.msra.mxu0 0
    %964 = vmatpush.bf16.xpose.msra.mxu0 0
    %965 = vmatpush.bf16.xpose.msra.mxu0 0
    %966 = vmatpush.bf16.xpose.msra.mxu0 0
    %967 = vmatpush.bf16.xpose.msra.mxu0 0
    %968 = vmatpush.bf16.xpose.msra.mxu0 %v959
    %969 = vmatmul.bf16.gmra.mxu0 %v956
    %v970 = vpop.f32.mrf.mxu0
    %v971 = vadd.f32 0.0, %v970
    %v972 = vpop.f32.mrf.mxu0
    %973 = vdwg.mxu0
    %v975 = vsel %vm897, %v371, 0
    %v978 = vsel %vm897, %v629, 0
    %980 = vmatpush.bf16.xpose.msra.mxu0 0
    %981 = vmatpush.bf16.xpose.msra.mxu0 0
    %982 = vmatpush.bf16.xpose.msra.mxu0 0
    %983 = vmatpush.bf16.xpose.msra.mxu0 0
    %984 = vmatpush.bf16.xpose.msra.mxu0 0
    %985 = vmatpush.bf16.xpose.msra.mxu0 0
    %986 = vmatpush.bf16.xpose.msra.mxu0 0
    %987 = vmatpush.bf16.xpose.msra.mxu0 %v978
    %988 = vmatmul.bf16.gmra.mxu0 %v975
    %v989 = vpop.f32.mrf.mxu0
    %v990 = vadd.f32 0.0, %v989
    %v991 = vpop.f32.mrf.mxu0
    %992 = vdwg.mxu0
    %v994 = vsel %vm897, %v374, 0
    %v997 = vsel %vm897, %v632, 0
    %999 = vmatpush.bf16.xpose.msra.mxu0 0
    %1000 = vmatpush.bf16.xpose.msra.mxu0 0
    %1001 = vmatpush.bf16.xpose.msra.mxu0 0
    %1002 = vmatpush.bf16.xpose.msra.mxu0 0
    %1003 = vmatpush.bf16.xpose.msra.mxu0 0
    %1004 = vmatpush.bf16.xpose.msra.mxu0 0
    %1005 = vmatpush.bf16.xpose.msra.mxu0 0
    %1006 = vmatpush.bf16.xpose.msra.mxu0 %v997
    %1007 = vmatmul.bf16.gmra.mxu0 %v994
    %v1008 = vpop.f32.mrf.mxu0
    %v1009 = vadd.f32 0.0, %v1008
    %v1010 = vpop.f32.mrf.mxu0
    %1011 = vdwg.mxu0
    %v1013 = vsel %vm897, %v377, 0
    %v1016 = vsel %vm897, %v635, 0
    %1018 = vmatpush.bf16.xpose.msra.mxu0 0
    %1019 = vmatpush.bf16.xpose.msra.mxu0 0
    %1020 = vmatpush.bf16.xpose.msra.mxu0 0
    %1021 = vmatpush.bf16.xpose.msra.mxu0 0
    %1022 = vmatpush.bf16.xpose.msra.mxu0 0
    %1023 = vmatpush.bf16.xpose.msra.mxu0 0
    %1024 = vmatpush.bf16.xpose.msra.mxu0 0
    %1025 = vmatpush.bf16.xpose.msra.mxu0 %v1016
    %1026 = vmatmul.bf16.gmra.mxu0 %v1013
    %v1027 = vpop.f32.mrf.mxu0
    %v1028 = vadd.f32 0.0, %v1027
    %v1029 = vpop.f32.mrf.mxu0
    %1030 = vdwg.mxu0
    %v1032 = vsel %vm897, %v380, 0
    %v1035 = vsel %vm897, %v638, 0
    %1037 = vmatpush.bf16.xpose.msra.mxu0 0
    %1038 = vmatpush.bf16.xpose.msra.mxu0 0
    %1039 = vmatpush.bf16.xpose.msra.mxu0 0
    %1040 = vmatpush.bf16.xpose.msra.mxu0 0
    %1041 = vmatpush.bf16.xpose.msra.mxu0 0
    %1042 = vmatpush.bf16.xpose.msra.mxu0 0
    %1043 = vmatpush.bf16.xpose.msra.mxu0 0
    %1044 = vmatpush.bf16.xpose.msra.mxu0 %v1035
    %1045 = vmatmul.bf16.gmra.mxu0 %v1032
    %v1046 = vpop.f32.mrf.mxu0
    %v1047 = vadd.f32 0.0, %v1046
    %v1048 = vpop.f32.mrf.mxu0
    %1049 = vdwg.mxu0
    %v1050 = vmul.f32 %v914, 0.35355338
    %v1051 = vmul.f32 %v933, 0.35355338
    %v1052 = vmul.f32 %v952, 0.35355338
    %v1053 = vmul.f32 %v971, 0.35355338
    %v1054 = vmul.f32 %v990, 0.35355338
    %v1055 = vmul.f32 %v1009, 0.35355338
    %v1056 = vmul.f32 %v1028, 0.35355338
    %v1057 = vmul.f32 %v1047, 0.35355338
    %v1058 = vld [vmem:[#allocation2] sm:$0xff]
    %v1060 = vrot.slane %v1058, 1
    %v1061 = vrot.slane %v1058, 2
    %v1062 = vrot.slane %v1058, 3
    %v1063 = vrot.slane %v1058, 4
    %v1064 = vrot.slane %v1058, 5
    %v1065 = vrot.slane %v1058, 6
    %v1066 = vrot.slane %v1058, 7
    %v1067 = vperm.slane %v1058, 0
    %v1068 = vperm.slane %v1060, 0
    %v1069 = vperm.slane %v1061, 0
    %v1070 = vperm.slane %v1062, 0
    %v1071 = vperm.slane %v1063, 0
    %v1072 = vperm.slane %v1064, 0
    %v1073 = vperm.slane %v1065, 0
    %v1074 = vperm.slane %v1066, 0
    %v1083 = vadd.f32 %v1050, %v1067
    %v1084 = vadd.f32 %v1051, %v1068
    %v1085 = vadd.f32 %v1052, %v1069
    %v1086 = vadd.f32 %v1053, %v1070
    %v1087 = vadd.f32 %v1054, %v1071
    %v1088 = vadd.f32 %v1055, %v1072
    %v1089 = vadd.f32 %v1056, %v1073
    %v1090 = vadd.f32 %v1057, %v1074
    %v1091 = vsel %vm897, %v1083, -inf
    %1092 = vmax.xlane.f32.xlu0 %v1091
    %v1093 = vpop.xlane.xlu0 %1092
    %v1094 = vsel %vm897, %v1084, -inf
    %1095 = vmax.xlane.f32.xlu0 %v1094
    %v1096 = vpop.xlane.xlu0 %1095
    %v1097 = vsel %vm897, %v1085, -inf
    %1098 = vmax.xlane.f32.xlu0 %v1097
    %v1099 = vpop.xlane.xlu0 %1098
    %v1100 = vsel %vm897, %v1086, -inf
    %1101 = vmax.xlane.f32.xlu0 %v1100
    %v1102 = vpop.xlane.xlu0 %1101
    %v1103 = vsel %vm897, %v1087, -inf
    %1104 = vmax.xlane.f32.xlu0 %v1103
    %v1105 = vpop.xlane.xlu0 %1104
    %v1106 = vsel %vm897, %v1088, -inf
    %1107 = vmax.xlane.f32.xlu0 %v1106
    %v1108 = vpop.xlane.xlu0 %1107
    %v1109 = vsel %vm897, %v1089, -inf
    %1110 = vmax.xlane.f32.xlu0 %v1109
    %v1111 = vpop.xlane.xlu0 %1110
    %v1112 = vsel %vm897, %v1090, -inf
    %1113 = vmax.xlane.f32.xlu0 %v1112
    %v1114 = vpop.xlane.xlu0 %1113
    %v1115 = vsub.f32 %v1083, %v1093
    %v1116 = vsub.f32 %v1084, %v1096
    %v1117 = vsub.f32 %v1085, %v1099
    %v1118 = vsub.f32 %v1086, %v1102
    %v1119 = vsub.f32 %v1087, %v1105
    %v1120 = vsub.f32 %v1088, %v1108
    %v1121 = vsub.f32 %v1089, %v1111
    %v1122 = vsub.f32 %v1090, %v1114
    %v1123 = vmul.f32 %v1115, 1.442695
    %v1124 = vpow.pop %v1123
    %v1125 = vmul.f32 %v1116, 1.442695
    %v1126 = vpow.pop %v1125
    %v1127 = vmul.f32 %v1117, 1.442695
    %v1128 = vpow.pop %v1127
    %v1129 = vmul.f32 %v1118, 1.442695
    %v1130 = vpow.pop %v1129
    %v1131 = vmul.f32 %v1119, 1.442695
    %v1132 = vpow.pop %v1131
    %v1133 = vmul.f32 %v1120, 1.442695
    %v1134 = vpow.pop %v1133
    %v1135 = vmul.f32 %v1121, 1.442695
    %v1136 = vpow.pop %v1135
    %v1137 = vmul.f32 %v1122, 1.442695
    %v1138 = vpow.pop %v1137
    %v1139 = vsel %vm897, %v1124, 0.0
    %1140 = vadd.xlane.f32.xlu0 %v1139
    %v1141 = vpop.xlane.xlu0 %1140
    %v1142 = vsel %vm897, %v1126, 0.0
    %1143 = vadd.xlane.f32.xlu0 %v1142
    %v1144 = vpop.xlane.xlu0 %1143
    %v1145 = vsel %vm897, %v1128, 0.0
    %1146 = vadd.xlane.f32.xlu0 %v1145
    %v1147 = vpop.xlane.xlu0 %1146
    %v1148 = vsel %vm897, %v1130, 0.0
    %1149 = vadd.xlane.f32.xlu0 %v1148
    %v1150 = vpop.xlane.xlu0 %1149
    %v1151 = vsel %vm897, %v1132, 0.0
    %1152 = vadd.xlane.f32.xlu0 %v1151
    %v1153 = vpop.xlane.xlu0 %1152
    %v1154 = vsel %vm897, %v1134, 0.0
    %1155 = vadd.xlane.f32.xlu0 %v1154
    %v1156 = vpop.xlane.xlu0 %1155
    %v1157 = vsel %vm897, %v1136, 0.0
    %1158 = vadd.xlane.f32.xlu0 %v1157
    %v1159 = vpop.xlane.xlu0 %1158
    %v1160 = vsel %vm897, %v1138, 0.0
    %1161 = vadd.xlane.f32.xlu0 %v1160
    %v1162 = vpop.xlane.xlu0 %1161
    %v1163 = vrcp.pop %v1141
    %v1164 = vrcp.pop %v1144
    %v1165 = vrcp.pop %v1147
    %v1166 = vrcp.pop %v1150
    %v1167 = vrcp.pop %v1153
    %v1168 = vrcp.pop %v1156
    %v1169 = vrcp.pop %v1159
    %v1170 = vrcp.pop %v1162
    %v1171 = vmul.f32 %v1124, %v1163
    %v1172 = vmul.f32 %v1126, %v1164
    %v1173 = vmul.f32 %v1128, %v1165
    %v1174 = vmul.f32 %v1130, %v1166
    %v1175 = vmul.f32 %v1132, %v1167
    %v1176 = vmul.f32 %v1134, %v1168
    %v1177 = vmul.f32 %v1136, %v1169
    %v1178 = vmul.f32 %v1138, %v1170
    %v1179 = vpack.c.bf16 %v1171, %v1171
    %v1180 = vpack.c.bf16 %v1172, %v1172
    %v1181 = vpack.c.bf16 %v1173, %v1173
    %v1182 = vpack.c.bf16 %v1174, %v1174
    %v1183 = vpack.c.bf16 %v1175, %v1175
    %v1184 = vpack.c.bf16 %v1176, %v1176
    %v1185 = vpack.c.bf16 %v1177, %v1177
    %v1186 = vpack.c.bf16 %v1178, %v1178
    %v1188 = vsel %vm897, %v1179, 0
    %vm1190 = vcmask 1043456
    %v1192 = vsel %vm1190, %v875, 0
    %1194 = vmatpush.bf16.msra.mxu0 0
    %1195 = vmatpush.bf16.msra.mxu0 0
    %1196 = vmatpush.bf16.msra.mxu0 0
    %1197 = vmatpush.bf16.msra.mxu0 0
    %1198 = vmatpush.bf16.msra.mxu0 0
    %1199 = vmatpush.bf16.msra.mxu0 0
    %1200 = vmatpush.bf16.msra.mxu0 0
    %1201 = vmatpush.bf16.msra.mxu0 %v1192
    %1202 = vmatmul.bf16.gmra.mxu0 %v1188
    %v1203 = vpop.f32.mrf.mxu0
    %v1204 = vadd.f32 0.0, %v1203
    %v1205 = vpop.f32.mrf.mxu0
    %1206 = vdwg.mxu0
    %v1208 = vsel %vm897, %v1180, 0
    %v1211 = vsel %vm1190, %v878, 0
    %1213 = vmatpush.bf16.msra.mxu0 0
    %1214 = vmatpush.bf16.msra.mxu0 0
    %1215 = vmatpush.bf16.msra.mxu0 0
    %1216 = vmatpush.bf16.msra.mxu0 0
    %1217 = vmatpush.bf16.msra.mxu0 0
    %1218 = vmatpush.bf16.msra.mxu0 0
    %1219 = vmatpush.bf16.msra.mxu0 0
    %1220 = vmatpush.bf16.msra.mxu0 %v1211
    %1221 = vmatmul.bf16.gmra.mxu0 %v1208
    %v1222 = vpop.f32.mrf.mxu0
    %v1223 = vadd.f32 0.0, %v1222
    %v1224 = vpop.f32.mrf.mxu0
    %1225 = vdwg.mxu0
    %v1227 = vsel %vm897, %v1181, 0
    %v1230 = vsel %vm1190, %v881, 0
    %1232 = vmatpush.bf16.msra.mxu0 0
    %1233 = vmatpush.bf16.msra.mxu0 0
    %1234 = vmatpush.bf16.msra.mxu0 0
    %1235 = vmatpush.bf16.msra.mxu0 0
    %1236 = vmatpush.bf16.msra.mxu0 0
    %1237 = vmatpush.bf16.msra.mxu0 0
    %1238 = vmatpush.bf16.msra.mxu0 0
    %1239 = vmatpush.bf16.msra.mxu0 %v1230
    %1240 = vmatmul.bf16.gmra.mxu0 %v1227
    %v1241 = vpop.f32.mrf.mxu0
    %v1242 = vadd.f32 0.0, %v1241
    %v1243 = vpop.f32.mrf.mxu0
    %1244 = vdwg.mxu0
    %v1246 = vsel %vm897, %v1182, 0
    %v1249 = vsel %vm1190, %v884, 0
    %1251 = vmatpush.bf16.msra.mxu0 0
    %1252 = vmatpush.bf16.msra.mxu0 0
    %1253 = vmatpush.bf16.msra.mxu0 0
    %1254 = vmatpush.bf16.msra.mxu0 0
    %1255 = vmatpush.bf16.msra.mxu0 0
    %1256 = vmatpush.bf16.msra.mxu0 0
    %1257 = vmatpush.bf16.msra.mxu0 0
    %1258 = vmatpush.bf16.msra.mxu0 %v1249
    %1259 = vmatmul.bf16.gmra.mxu0 %v1246
    %v1260 = vpop.f32.mrf.mxu0
    %v1261 = vadd.f32 0.0, %v1260
    %v1262 = vpop.f32.mrf.mxu0
    %1263 = vdwg.mxu0
    %v1265 = vsel %vm897, %v1183, 0
    %v1268 = vsel %vm1190, %v887, 0
    %1270 = vmatpush.bf16.msra.mxu0 0
    %1271 = vmatpush.bf16.msra.mxu0 0
    %1272 = vmatpush.bf16.msra.mxu0 0
    %1273 = vmatpush.bf16.msra.mxu0 0
    %1274 = vmatpush.bf16.msra.mxu0 0
    %1275 = vmatpush.bf16.msra.mxu0 0
    %1276 = vmatpush.bf16.msra.mxu0 0
    %1277 = vmatpush.bf16.msra.mxu0 %v1268
    %1278 = vmatmul.bf16.gmra.mxu0 %v1265
    %v1279 = vpop.f32.mrf.mxu0
    %v1280 = vadd.f32 0.0, %v1279
    %v1281 = vpop.f32.mrf.mxu0
    %1282 = vdwg.mxu0
    %v1284 = vsel %vm897, %v1184, 0
    %v1287 = vsel %vm1190, %v890, 0
    %1289 = vmatpush.bf16.msra.mxu0 0
    %1290 = vmatpush.bf16.msra.mxu0 0
    %1291 = vmatpush.bf16.msra.mxu0 0
    %1292 = vmatpush.bf16.msra.mxu0 0
    %1293 = vmatpush.bf16.msra.mxu0 0
    %1294 = vmatpush.bf16.msra.mxu0 0
    %1295 = vmatpush.bf16.msra.mxu0 0
    %1296 = vmatpush.bf16.msra.mxu0 %v1287
    %1297 = vmatmul.bf16.gmra.mxu0 %v1284
    %v1298 = vpop.f32.mrf.mxu0
    %v1299 = vadd.f32 0.0, %v1298
    %v1300 = vpop.f32.mrf.mxu0
    %1301 = vdwg.mxu0
    %v1303 = vsel %vm897, %v1185, 0
    %v1306 = vsel %vm1190, %v893, 0
    %1308 = vmatpush.bf16.msra.mxu0 0
    %1309 = vmatpush.bf16.msra.mxu0 0
    %1310 = vmatpush.bf16.msra.mxu0 0
    %1311 = vmatpush.bf16.msra.mxu0 0
    %1312 = vmatpush.bf16.msra.mxu0 0
    %1313 = vmatpush.bf16.msra.mxu0 0
    %1314 = vmatpush.bf16.msra.mxu0 0
    %1315 = vmatpush.bf16.msra.mxu0 %v1306
    %1316 = vmatmul.bf16.gmra.mxu0 %v1303
    %v1317 = vpop.f32.mrf.mxu0
    %v1318 = vadd.f32 0.0, %v1317
    %v1319 = vpop.f32.mrf.mxu0
    %1320 = vdwg.mxu0
    %v1322 = vsel %vm897, %v1186, 0
    %v1325 = vsel %vm1190, %v896, 0
    %1327 = vmatpush.bf16.msra.mxu0 0
    %1328 = vmatpush.bf16.msra.mxu0 0
    %1329 = vmatpush.bf16.msra.mxu0 0
    %1330 = vmatpush.bf16.msra.mxu0 0
    %1331 = vmatpush.bf16.msra.mxu0 0
    %1332 = vmatpush.bf16.msra.mxu0 0
    %1333 = vmatpush.bf16.msra.mxu0 0
    %1334 = vmatpush.bf16.msra.mxu0 %v1325
    %1335 = vmatmul.bf16.gmra.mxu0 %v1322
    %v1336 = vpop.f32.mrf.mxu0
    %v1337 = vadd.f32 0.0, %v1336
    %v1338 = vpop.f32.mrf.mxu0
    %1339 = vdwg.mxu0
    %v1340 = vrot.slane %v1242, 4
    %vm1341 = vcmask 1047556
    %v1342 = vsel %vm1341, %v1340, %v1204
    %v1343 = vrot.slane %v1204, 4
    %v1344 = vsel %vm1341, %v1242, %v1343
    %v1346 = vunpack.c.l.s4 1983009808
    %v1347 = vunpack.c.0.s8 %v1346
    %v1348 = vperm.slane %v1342, %v1347
    %v1350 = vunpack.c.l.s4 1983009808
    %v1351 = vunpack.c.0.s8 %v1350
    %v1352 = vperm.slane %v1344, %v1351
    %v1353 = vrot.slane %v1261, 4
    %v1354 = vsel %vm1341, %v1353, %v1223
    %v1355 = vrot.slane %v1223, 4
    %v1356 = vsel %vm1341, %v1261, %v1355
    %v1358 = vunpack.c.l.s4 1983009808
    %v1359 = vunpack.c.0.s8 %v1358
    %v1360 = vperm.slane %v1354, %v1359
    %v1362 = vunpack.c.l.s4 1983009808
    %v1363 = vunpack.c.0.s8 %v1362
    %v1364 = vperm.slane %v1356, %v1363
    %v1365 = vrot.slane %v1360, 4
    %v1366 = vsel %vm1341, %v1365, %v1348
    %v1367 = vrot.slane %v1348, 4
    %v1368 = vsel %vm1341, %v1360, %v1367
    %v1370 = vunpack.c.l.s4 1934713408
    %v1371 = vunpack.c.0.s8 %v1370
    %v1372 = vperm.slane %v1366, %v1371
    %v1374 = vunpack.c.l.s4 1934713408
    %v1375 = vunpack.c.0.s8 %v1374
    %v1376 = vperm.slane %v1368, %v1375
    %v1377 = vrot.slane %v1364, 4
    %v1378 = vsel %vm1341, %v1377, %v1352
    %v1379 = vrot.slane %v1352, 4
    %v1380 = vsel %vm1341, %v1364, %v1379
    %v1382 = vunpack.c.l.s4 1934713408
    %v1383 = vunpack.c.0.s8 %v1382
    %v1384 = vperm.slane %v1378, %v1383
    %v1386 = vunpack.c.l.s4 1934713408
    %v1387 = vunpack.c.0.s8 %v1386
    %v1388 = vperm.slane %v1380, %v1387
    %v1389 = vrot.slane %v1372, 4
    %v1390 = vsel %vm1341, 0.0, %v1389
    %v1391 = vrot.slane %v1376, 4
    %v1392 = vsel %vm1341, 0.0, %v1391
    %v1393 = vrot.slane %v1384, 4
    %v1394 = vsel %vm1341, 0.0, %v1393
    %v1395 = vrot.slane %v1388, 4
    %v1396 = vsel %vm1341, 0.0, %v1395
    %v1397 = vrot.slane %v1318, 4
    %v1398 = vsel %vm1341, %v1397, %v1280
    %v1399 = vrot.slane %v1280, 4
    %v1400 = vsel %vm1341, %v1318, %v1399
    %v1402 = vunpack.c.l.s4 1983009808
    %v1403 = vunpack.c.0.s8 %v1402
    %v1404 = vperm.slane %v1398, %v1403
    %v1406 = vunpack.c.l.s4 1983009808
    %v1407 = vunpack.c.0.s8 %v1406
    %v1408 = vperm.slane %v1400, %v1407
    %v1409 = vrot.slane %v1337, 4
    %v1410 = vsel %vm1341, %v1409, %v1299
    %v1411 = vrot.slane %v1299, 4
    %v1412 = vsel %vm1341, %v1337, %v1411
    %v1414 = vunpack.c.l.s4 1983009808
    %v1415 = vunpack.c.0.s8 %v1414
    %v1416 = vperm.slane %v1410, %v1415
    %v1418 = vunpack.c.l.s4 1983009808
    %v1419 = vunpack.c.0.s8 %v1418
    %v1420 = vperm.slane %v1412, %v1419
    %v1421 = vrot.slane %v1416, 4
    %v1422 = vsel %vm1341, %v1421, %v1404
    %v1423 = vrot.slane %v1404, 4
    %v1424 = vsel %vm1341, %v1416, %v1423
    %v1426 = vunpack.c.l.s4 1934713408
    %v1427 = vunpack.c.0.s8 %v1426
    %v1428 = vperm.slane %v1422, %v1427
    %v1430 = vunpack.c.l.s4 1934713408
    %v1431 = vunpack.c.0.s8 %v1430
    %v1432 = vperm.slane %v1424, %v1431
    %v1433 = vrot.slane %v1420, 4
    %v1434 = vsel %vm1341, %v1433, %v1408
    %v1435 = vrot.slane %v1408, 4
    %v1436 = vsel %vm1341, %v1420, %v1435
    %v1438 = vunpack.c.l.s4 1934713408
    %v1439 = vunpack.c.0.s8 %v1438
    %v1440 = vperm.slane %v1434, %v1439
    %v1442 = vunpack.c.l.s4 1934713408
    %v1443 = vunpack.c.0.s8 %v1442
    %v1444 = vperm.slane %v1436, %v1443
    %v1445 = vrot.slane %v1428, 4
    %v1446 = vsel %vm1341, 0.0, %v1445
    %v1447 = vrot.slane %v1432, 4
    %v1448 = vsel %vm1341, 0.0, %v1447
    %v1449 = vrot.slane %v1440, 4
    %v1450 = vsel %vm1341, 0.0, %v1449
    %v1451 = vrot.slane %v1444, 4
    %v1452 = vsel %vm1341, 0.0, %v1451
    %v1453 = vsel %vm1341, %v1391, %v1372
    %v1455 = vunpack.c.l.s4 1983009808
    %v1456 = vunpack.c.0.s8 %v1455
    %v1457 = vperm.slane %v1453, %v1456
    %v1458 = vrot.slane %v1392, 4
    %v1459 = vsel %vm1341, %v1458, %v1390
    %v1461 = vunpack.c.l.s4 1983009808
    %v1462 = vunpack.c.0.s8 %v1461
    %v1463 = vperm.slane %v1459, %v1462
    %v1464 = vsel %vm1341, %v1395, %v1384
    %v1466 = vunpack.c.l.s4 1983009808
    %v1467 = vunpack.c.0.s8 %v1466
    %v1468 = vperm.slane %v1464, %v1467
    %v1469 = vrot.slane %v1396, 4
    %v1470 = vsel %vm1341, %v1469, %v1394
    %v1472 = vunpack.c.l.s4 1983009808
    %v1473 = vunpack.c.0.s8 %v1472
    %v1474 = vperm.slane %v1470, %v1473
    %v1475 = vrot.slane %v1463, 4
    %v1476 = vsel %vm1341, %v1475, %v1457
    %v1477 = vrot.slane %v1457, 4
    %v1478 = vsel %vm1341, %v1463, %v1477
    %v1480 = vunpack.c.l.s4 1934713408
    %v1481 = vunpack.c.0.s8 %v1480
    %v1482 = vperm.slane %v1476, %v1481
    %v1484 = vunpack.c.l.s4 1934713408
    %v1485 = vunpack.c.0.s8 %v1484
    %v1486 = vperm.slane %v1478, %v1485
    %v1487 = vrot.slane %v1474, 4
    %v1488 = vsel %vm1341, %v1487, %v1468
    %v1489 = vrot.slane %v1468, 4
    %v1490 = vsel %vm1341, %v1474, %v1489
    %v1492 = vunpack.c.l.s4 1934713408
    %v1493 = vunpack.c.0.s8 %v1492
    %v1494 = vperm.slane %v1488, %v1493
    %v1496 = vunpack.c.l.s4 1934713408
    %v1497 = vunpack.c.0.s8 %v1496
    %v1498 = vperm.slane %v1490, %v1497
    %v1499 = vrot.slane %v1494, 4
    %v1500 = vsel %vm1341, %v1499, %v1482
    %v1501 = vrot.slane %v1482, 4
    %v1502 = vsel %vm1341, %v1494, %v1501
    %v1503 = vrot.slane %v1498, 4
    %v1504 = vsel %vm1341, %v1503, %v1486
    %v1505 = vrot.slane %v1486, 4
    %v1506 = vsel %vm1341, %v1498, %v1505
    %v1507 = vsel %vm1341, %v1447, %v1428
    %v1509 = vunpack.c.l.s4 1983009808
    %v1510 = vunpack.c.0.s8 %v1509
    %v1511 = vperm.slane %v1507, %v1510
    %v1512 = vrot.slane %v1448, 4
    %v1513 = vsel %vm1341, %v1512, %v1446
    %v1515 = vunpack.c.l.s4 1983009808
    %v1516 = vunpack.c.0.s8 %v1515
    %v1517 = vperm.slane %v1513, %v1516
    %v1518 = vsel %vm1341, %v1451, %v1440
    %v1520 = vunpack.c.l.s4 1983009808
    %v1521 = vunpack.c.0.s8 %v1520
    %v1522 = vperm.slane %v1518, %v1521
    %v1523 = vrot.slane %v1452, 4
    %v1524 = vsel %vm1341, %v1523, %v1450
    %v1526 = vunpack.c.l.s4 1983009808
    %v1527 = vunpack.c.0.s8 %v1526
    %v1528 = vperm.slane %v1524, %v1527
    %v1529 = vrot.slane %v1517, 4
    %v1530 = vsel %vm1341, %v1529, %v1511
    %v1531 = vrot.slane %v1511, 4
    %v1532 = vsel %vm1341, %v1517, %v1531
    %v1534 = vunpack.c.l.s4 1934713408
    %v1535 = vunpack.c.0.s8 %v1534
    %v1536 = vperm.slane %v1530, %v1535
    %v1538 = vunpack.c.l.s4 1934713408
    %v1539 = vunpack.c.0.s8 %v1538
    %v1540 = vperm.slane %v1532, %v1539
    %v1541 = vrot.slane %v1528, 4
    %v1542 = vsel %vm1341, %v1541, %v1522
    %v1543 = vrot.slane %v1522, 4
    %v1544 = vsel %vm1341, %v1528, %v1543
    %v1546 = vunpack.c.l.s4 1934713408
    %v1547 = vunpack.c.0.s8 %v1546
    %v1548 = vperm.slane %v1542, %v1547
    %v1550 = vunpack.c.l.s4 1934713408
    %v1551 = vunpack.c.0.s8 %v1550
    %v1552 = vperm.slane %v1544, %v1551
    %v1553 = vrot.slane %v1548, 4
    %v1554 = vsel %vm1341, %v1553, %v1536
    %v1555 = vrot.slane %v1536, 4
    %v1556 = vsel %vm1341, %v1548, %v1555
    %v1557 = vrot.slane %v1552, 4
    %v1558 = vsel %vm1341, %v1557, %v1540
    %v1559 = vrot.slane %v1540, 4
    %v1560 = vsel %vm1341, %v1552, %v1559
    %1563 = vrot.lane.b32.xlu0 %v1502, 8
    %v1564 = vpop.permute.xlu0 %1563
    %1565 = vrot.lane.b32.xlu0 %v1556, 8
    %v1566 = vpop.permute.xlu0 %1565
    %1571 = vrot.lane.b32.xlu0 %v1504, 16
    %v1572 = vpop.permute.xlu0 %1571
    %1573 = vrot.lane.b32.xlu0 %v1558, 16
    %v1574 = vpop.permute.xlu0 %1573
    %1579 = vrot.lane.b32.xlu0 %v1506, 24
    %v1580 = vpop.permute.xlu0 %1579
    %1581 = vrot.lane.b32.xlu0 %v1560, 24
    %v1582 = vpop.permute.xlu0 %1581
    %v1585 = vsel %vm897, %v1500, %v1564
    %v1586 = vsel %vm897, %v1554, %v1566
    %vm1587 = vcmask 130048
    %v1588 = vsel %vm1587, %v1585, %v1572
    %v1589 = vsel %vm1587, %v1586, %v1574
    %vm1590 = vcmask 195584
    %v1591 = vsel %vm1590, %v1588, %v1580
    %v1592 = vsel %vm1590, %v1589, %v1582
    %v1593 = vpack.c.bf16 %v1592, %v1591
    %v1594 = vld [vmem:[%s3] sm:$0xf]
    %v1595 = vld [vmem:[%s3 + $0x4] sm:$0xf]
    %v1596 = vld [vmem:[%s3 + $0x8] sm:$0xf]
    %v1597 = vld [vmem:[%s3 + $0xc] sm:$0xf]
    %v1598 = vperm.slane %v79, 3
    %v1603 = vunpack.c.l.b16 %v1594
    %v1604 = vunpack.c.l.b16 %v1595
    %v1605 = vunpack.c.l.b16 %v1596
    %v1606 = vunpack.c.l.b16 %v1597
    %v1607 = vpack.c.b16 %v1604, %v1603
    %v1608 = vpack.c.b16 %v1606, %v1605
    %v1612 = vsel %vm97, %v1593, 0
    %1614 = vmatpush.bf16.msra.mxu0 0
    %1615 = vmatpush.bf16.msra.mxu0 0
    %1616 = vmatpush.bf16.msra.mxu0 0
    %1617 = vmatpush.bf16.msra.mxu0 0
    %1618 = vmatpush.bf16.msra.mxu0 0
    %1619 = vmatpush.bf16.msra.mxu0 0
    %1620 = vmatpush.bf16.msra.mxu0 %v1608
    %1621 = vmatpush.bf16.msra.mxu0 %v1607
    %1622 = vmatmul.bf16.gmra.mxu0 %v1612
    %v1623 = vpop.f32.mrf.mxu0
    %v1624 = vadd.f32 %v1598, %v1623
    %v1625 = vpop.f32.mrf.mxu0
    %v1626 = vadd.f32 %v1598, %v1625
    %1627 = vdwg.mxu0
    %v1628 = vadd.f32 %v1624, %v76
    %v1629 = vadd.f32 %v1626, %v77
    %v1630 = vsel %vm97, %v1628, 0.0
    %1631 = vadd.xlane.f32.xlu0 %v1630
    %v1632 = vpop.xlane.xlu0 %1631
    %v1633 = vsel %vm97, %v1629, 0.0
    %1634 = vadd.xlane.f32.xlu0 %v1633
    %v1635 = vpop.xlane.xlu0 %1634
    %v1636 = vrcp.pop 32.0
    %v1637 = vmul.f32 32.0, %v1636
    %v1638 = vsub.f32 1.0, %v1637
    %v1639 = vmul.f32 %v1636, %v1638
    %v1640 = vadd.f32 %v1636, %v1639
    %vm1641 = vweird.f32 %v1636
    %v1642 = vsel %vm1641, %v1636, %v1640
    %v1643 = vmul.f32 %v1632, %v1642
    %v1644 = vmul.f32 %v1635, %v1642
    %v1645 = vsub.f32 %v1628, %v1643
    %v1646 = vsub.f32 %v1629, %v1644
    %v1647 = vmul.f32 %v1645, %v1645
    %v1648 = vmul.f32 %v1646, %v1646
    %v1649 = vsel %vm97, %v1647, 0.0
    %1650 = vadd.xlane.f32.xlu0 %v1649
    %v1651 = vpop.xlane.xlu0 %1650
    %v1652 = vsel %vm97, %v1648, 0.0
    %1653 = vadd.xlane.f32.xlu0 %v1652
    %v1654 = vpop.xlane.xlu0 %1653
    %v1655 = vmul.f32 %v1651, %v1642
    %v1656 = vmul.f32 %v1654, %v1642
    %v1657 = vadd.f32 %v1655, 1e-12
    %v1658 = vadd.f32 %v1656, 1e-12
    %v1659 = vrsqrt.pop %v1657
    %v1660 = vmul.f32 %v1659, %v1657
    %v1661 = vmul.f32 %v1660, %v1659
    %v1662 = vmul.f32 0.5, %v1661
    %v1663 = vsub.f32 1.5, %v1662
    %v1664 = vmul.f32 %v1659, %v1663
    %vm1665 = vweird.f32 %v1657
    %vm1666 = vweird.f32 %v1659
    %vm1667 = vmor %vm1665, %vm1666
    %v1668 = vsel %vm1667, %v1659, %v1664
    %v1669 = vrsqrt.pop %v1658
    %v1670 = vmul.f32 %v1669, %v1658
    %v1671 = vmul.f32 %v1670, %v1669
    %v1672 = vmul.f32 0.5, %v1671
    %v1673 = vsub.f32 1.5, %v1672
    %v1674 = vmul.f32 %v1669, %v1673
    %vm1675 = vweird.f32 %v1658
    %vm1676 = vweird.f32 %v1669
    %vm1677 = vmor %vm1675, %vm1676
    %v1678 = vsel %vm1677, %v1669, %v1674
    %v1679 = vmul.f32 %v1645, %v1668
    %v1680 = vmul.f32 %v1646, %v1678
    %v1681 = vperm.slane %v79, 4
    %v1682 = vmul.f32 %v1679, %v1681
    %v1683 = vmul.f32 %v1680, %v1681
    %v1684 = vperm.slane %v79, 5
    %v1685 = vadd.f32 %v1682, %v1684
    %v1686 = vadd.f32 %v1683, %v1684
    %v1687 = vpack.c.bf16 %v1686, %v1685
    %v1688 = vld [vmem:[#allocation5] sm:$0xf]
    %v1689 = vld [vmem:[#allocation5 + $0x4] sm:$0xf]
    %v1690 = vld [vmem:[#allocation5 + $0x8] sm:$0xf]
    %v1691 = vld [vmem:[#allocation5 + $0xc] sm:$0xf]
    %v1692 = vld [vmem:[%s6] sm:$0x1]
    %v1694 = vperm.slane %v1692, 0
    %v1700 = vunpack.c.l.b16 %v1688
    %v1701 = vunpack.c.l.b16 %v1689
    %v1702 = vunpack.c.l.b16 %v1690
    %v1703 = vunpack.c.l.b16 %v1691
    %v1704 = vpack.c.b16 %v1701, %v1700
    %v1705 = vpack.c.b16 %v1703, %v1702
    %v1709 = vsel %vm97, %v1687, 0
    %1711 = vmatpush.bf16.msra.mxu0 0
    %1712 = vmatpush.bf16.msra.mxu0 0
    %1713 = vmatpush.bf16.msra.mxu0 0
    %1714 = vmatpush.bf16.msra.mxu0 0
    %1715 = vmatpush.bf16.msra.mxu0 0
    %1716 = vmatpush.bf16.msra.mxu0 0
    %1717 = vmatpush.bf16.msra.mxu0 %v1705
    %1718 = vmatpush.bf16.msra.mxu0 %v1704
    %1719 = vmatmul.bf16.gmra.mxu0 %v1709
    %v1720 = vpop.f32.mrf.mxu0
    %v1721 = vadd.f32 %v1694, %v1720
    %v1722 = vpop.f32.mrf.mxu0
    %v1723 = vadd.f32 %v1694, %v1722
    %1724 = vdwg.mxu0
    %v1725 = vmul.f32 %v1721, 0.5
    %v1726 = vmul.f32 %v1723, 0.5
    %v1727 = vrcp.pop 1.4142135
    %v1728 = vmul.f32 1.4142135, %v1727
    %v1729 = vsub.f32 1.0, %v1728
    %v1730 = vmul.f32 %v1727, %v1729
    %v1731 = vadd.f32 %v1727, %v1730
    %vm1732 = vweird.f32 %v1727
    %v1733 = vsel %vm1732, %v1727, %v1731
    %v1734 = vmul.f32 %v1721, %v1733
    %v1735 = vmul.f32 %v1723, %v1733
    %v1736 = vmul.f32 %v1734, %v1734
    %v1737 = vmin.f32 16.0, %v1736
    %v1738 = vmul.f32 %v1737, 2.1237322e-06
    %v1739 = vadd.f32 %v1738, 0.00028619796
    %v1740 = vmul.f32 %v1737, %v1739
    %v1741 = vadd.f32 %v1740, 0.0036580483
    %v1742 = vmul.f32 %v1737, %v1741
    %v1743 = vadd.f32 %v1742, 0.05243302
    %v1744 = vmul.f32 %v1737, %v1743
    %v1745 = vadd.f32 %v1744, 0.18741608
    %v1746 = vmul.f32 %v1737, %v1745
    %v1747 = vadd.f32 %v1746, 1.1283791
    %v1748 = vmul.f32 %v1734, %v1747
    %v1749 = vmul.f32 %v1737, 3.8918573e-05
    %v1750 = vadd.f32 %v1749, 0.001143296
    %v1751 = vmul.f32 %v1737, %v1750
    %v1752 = vadd.f32 %v1751, 0.014752088
    %v1753 = vmul.f32 %v1737, %v1752
    %v1754 = vadd.f32 %v1753, 0.112945676
    %v1755 = vmul.f32 %v1737, %v1754
    %v1756 = vadd.f32 %v1755, 0.4994258
    %v1757 = vmul.f32 %v1737, %v1756
    %v1758 = vadd.f32 %v1757, 1.0
    %v1759 = vrcp.pop %v1758
    %v1760 = vmul.f32 %v1758, %v1759
    %v1761 = vsub.f32 1.0, %v1760
    %v1762 = vmul.f32 %v1759, %v1761
    %v1763 = vadd.f32 %v1759, %v1762
    %vm1764 = vweird.f32 %v1758
    %vm1765 = vweird.f32 %v1759
    %vm1766 = vmor %vm1764, %vm1765
    %v1767 = vsel %vm1766, %v1759, %v1763
    %v1768 = vand.u32 2147483647, %v1758
    %vm1769 = vcmp.eq.f32.partialorder %v1768, 8.507059e+37
    %v1770 = vand.u32 %v1758, 2147483648
    %v1771 = vor.u32 1.1754944e-38, %v1770
    %v1772 = vsel %vm1769, %v1771, %v1767
    %v1773 = vmul.f32 %v1748, %v1772
    %v1774 = vmin.f32 %v1773, 1.0
    %v1775 = vmax.f32 %v1774, -1.0
    %v1776 = vmul.f32 %v1735, %v1735
    %v1777 = vmin.f32 16.0, %v1776
    %v1778 = vmul.f32 %v1777, 2.1237322e-06
    %v1779 = vadd.f32 %v1778, 0.00028619796
    %v1780 = vmul.f32 %v1777, %v1779
    %v1781 = vadd.f32 %v1780, 0.0036580483
    %v1782 = vmul.f32 %v1777, %v1781
    %v1783 = vadd.f32 %v1782, 0.05243302
    %v1784 = vmul.f32 %v1777, %v1783
    %v1785 = vadd.f32 %v1784, 0.18741608
    %v1786 = vmul.f32 %v1777, %v1785
    %v1787 = vadd.f32 %v1786, 1.1283791
    %v1788 = vmul.f32 %v1735, %v1787
    %v1789 = vmul.f32 %v1777, 3.8918573e-05
    %v1790 = vadd.f32 %v1789, 0.001143296
    %v1791 = vmul.f32 %v1777, %v1790
    %v1792 = vadd.f32 %v1791, 0.014752088
    %v1793 = vmul.f32 %v1777, %v1792
    %v1794 = vadd.f32 %v1793, 0.112945676
    %v1795 = vmul.f32 %v1777, %v1794
    %v1796 = vadd.f32 %v1795, 0.4994258
    %v1797 = vmul.f32 %v1777, %v1796
    %v1798 = vadd.f32 %v1797, 1.0
    %v1799 = vrcp.pop %v1798
    %v1800 = vmul.f32 %v1798, %v1799
    %v1801 = vsub.f32 1.0, %v1800
    %v1802 = vmul.f32 %v1799, %v1801
    %v1803 = vadd.f32 %v1799, %v1802
    %vm1804 = vweird.f32 %v1798
    %vm1805 = vweird.f32 %v1799
    %vm1806 = vmor %vm1804, %vm1805
    %v1807 = vsel %vm1806, %v1799, %v1803
    %v1808 = vand.u32 2147483647, %v1798
    %vm1809 = vcmp.eq.f32.partialorder %v1808, 8.507059e+37
    %v1810 = vand.u32 %v1798, 2147483648
    %v1811 = vor.u32 1.1754944e-38, %v1810
    %v1812 = vsel %vm1809, %v1811, %v1807
    %v1813 = vmul.f32 %v1788, %v1812
    %v1814 = vmin.f32 %v1813, 1.0
    %v1815 = vmax.f32 %v1814, -1.0
    %v1816 = vadd.f32 %v1775, 1.0
    %v1817 = vadd.f32 %v1815, 1.0
    %v1818 = vmul.f32 %v1725, %v1816
    %v1819 = vmul.f32 %v1726, %v1817
    %v1820 = vpack.c.bf16 %v1819, %v1818
    %v1821 = vld [vmem:[%s5] sm:$0xf]
    %v1822 = vld [vmem:[%s5 + $0x4] sm:$0xf]
    %v1823 = vld [vmem:[%s5 + $0x8] sm:$0xf]
    %v1824 = vld [vmem:[%s5 + $0xc] sm:$0xf]
    %v1825 = vld [vmem:[%s5 + $0x10] sm:$0xf]
    %v1826 = vld [vmem:[%s5 + $0x14] sm:$0xf]
    %v1827 = vld [vmem:[%s5 + $0x18] sm:$0xf]
    %v1828 = vld [vmem:[%s5 + $0x1c] sm:$0xf]
    %v1829 = vperm.slane %v79, 6
    %v1838 = vunpack.c.l.b16 %v1821
    %v1839 = vunpack.c.l.b16 %v1822
    %v1840 = vunpack.c.l.b16 %v1823
    %v1841 = vunpack.c.l.b16 %v1824
    %v1842 = vunpack.c.l.b16 %v1825
    %v1843 = vunpack.c.l.b16 %v1826
    %v1844 = vunpack.c.l.b16 %v1827
    %v1845 = vunpack.c.l.b16 %v1828
    %v1846 = vpack.c.b16 %v1839, %v1838
    %v1847 = vpack.c.b16 %v1841, %v1840
    %v1848 = vpack.c.b16 %v1843, %v1842
    %v1849 = vpack.c.b16 %v1845, %v1844
    %vm1854 = vcmask 523264
    %v1856 = vsel %vm1854, %v1820, 0
    %1858 = vmatpush.bf16.msra.mxu0 0
    %1859 = vmatpush.bf16.msra.mxu0 0
    %1860 = vmatpush.bf16.msra.mxu0 0
    %1861 = vmatpush.bf16.msra.mxu0 0
    %1862 = vmatpush.bf16.msra.mxu0 %v1849
    %1863 = vmatpush.bf16.msra.mxu0 %v1848
    %1864 = vmatpush.bf16.msra.mxu0 %v1847
    %1865 = vmatpush.bf16.msra.mxu0 %v1846
    %1866 = vmatmul.bf16.gmra.mxu0 %v1856
    %v1867 = vpop.f32.mrf.mxu0
    %v1868 = vadd.f32 %v1829, %v1867
    %v1869 = vpop.f32.mrf.mxu0
    %v1870 = vadd.f32 %v1829, %v1869
    %1871 = vdwg.mxu0
    %v1872 = vadd.f32 %v1868, %v1685
    %v1873 = vadd.f32 %v1870, %v1686
    %v1874 = vsel %vm97, %v1872, 0.0
    %1875 = vadd.xlane.f32.xlu0 %v1874
    %v1876 = vpop.xlane.xlu0 %1875
    %v1877 = vsel %vm97, %v1873, 0.0
    %1878 = vadd.xlane.f32.xlu0 %v1877
    %v1879 = vpop.xlane.xlu0 %1878
    %v1880 = vmul.f32 %v1876, %v1642
    %v1881 = vmul.f32 %v1879, %v1642
    %v1882 = vsub.f32 %v1872, %v1880
    %v1883 = vsub.f32 %v1873, %v1881
    %v1884 = vmul.f32 %v1882, %v1882
    %v1885 = vmul.f32 %v1883, %v1883
    %v1886 = vsel %vm97, %v1884, 0.0
    %1887 = vadd.xlane.f32.xlu0 %v1886
    %v1888 = vpop.xlane.xlu0 %1887
    %v1889 = vsel %vm97, %v1885, 0.0
    %1890 = vadd.xlane.f32.xlu0 %v1889
    %v1891 = vpop.xlane.xlu0 %1890
    %v1892 = vmul.f32 %v1888, %v1642
    %v1893 = vmul.f32 %v1891, %v1642
    %v1894 = vadd.f32 %v1892, 1e-12
    %v1895 = vadd.f32 %v1893, 1e-12
    %v1896 = vrsqrt.pop %v1894
    %v1897 = vmul.f32 %v1896, %v1894
    %v1898 = vmul.f32 %v1897, %v1896
    %v1899 = vmul.f32 0.5, %v1898
    %v1900 = vsub.f32 1.5, %v1899
    %v1901 = vmul.f32 %v1896, %v1900
    %vm1902 = vweird.f32 %v1894
    %vm1903 = vweird.f32 %v1896
    %vm1904 = vmor %vm1902, %vm1903
    %v1905 = vsel %vm1904, %v1896, %v1901
    %v1906 = vrsqrt.pop %v1895
    %v1907 = vmul.f32 %v1906, %v1895
    %v1908 = vmul.f32 %v1907, %v1906
    %v1909 = vmul.f32 0.5, %v1908
    %v1910 = vsub.f32 1.5, %v1909
    %v1911 = vmul.f32 %v1906, %v1910
    %vm1912 = vweird.f32 %v1895
    %vm1913 = vweird.f32 %v1906
    %vm1914 = vmor %vm1912, %vm1913
    %v1915 = vsel %vm1914, %v1906, %v1911
    %v1916 = vmul.f32 %v1882, %v1905
    %v1917 = vmul.f32 %v1883, %v1915
    %v1918 = vperm.slane %v79, 7
    %v1919 = vmul.f32 %v1916, %v1918
    %v1920 = vmul.f32 %v1917, %v1918
    %v1921 = vperm.slane %v80, 0
    %v1922 = vadd.f32 %v1919, %v1921
    %v1923 = vadd.f32 %v1920, %v1921
    %1924 = vst.msk [vmem:[#allocation8] sm:$0xff] %vm97, %v1922
    %1925 = vst.msk [vmem:[#allocation8 + $0x8] sm:$0xff] %vm97, %v1923
    // Predicated region
    $region46: #{tpu_custom_call.1} parent=1 // pred_check
      _
    $region47: #{tpu_custom_call.1} parent=1 // pred_check_branch
      %1927 = sbr.rel (0) target = $region49
    $region48: #{tpu_custom_call.1} parent=1 // pred_region
      %1929 = vsyncadd [#allocation4], 0
      %s1930 = sshll.u32 [#allocation8], 4
      %s1931 = int_to_ptr.vmem [resolvable:$true] %s1930
      %s1932 = sshll.u32 %s8, 4
      %s1933 = int_to_ptr.hbm [resolvable:$true] %s1932
      %1938 = dma.vmem_to_hbm [thread:$0]  %s1931, 256, %s1933, [#allocation4], 128, 128, 8
    $region49: #{tpu_custom_call.1} parent=1 // pred_fallthru
      _
    // Predicated region
    $region50: #{tpu_custom_call.1} parent=1 // pred_check
      _
    $region51: #{tpu_custom_call.1} parent=1 // pred_check_branch
      %1940 = sbr.rel (0) target = $region53
    $region52: #{tpu_custom_call.1} parent=1 // pred_region
      %1942 = dma.done [#allocation4], 256
    $region53: #{tpu_custom_call.1} parent=1 // pred_fallthru
      _
    %1943 = vsyncpa [#allocation3], 1
    %1944 = vsyncpa [#allocation6], 1
    %1945 = vsyncpa [#allocation4], 1

</llo_original>
